<compile_context>
chip_gen: v7x
topology: tpu7x:2x2x1
jax: 0.10.0
libtpu: 0.0.40
codegen_flags: <defaults>
</compile_context>

<pallas_src>
import functools

import jax
import jax.numpy as jnp
from jax import lax
from jax.experimental import pallas as pl
from jax.experimental.pallas import tpu as pltpu


def _round_up(x, m):
    return ((x + m - 1) // m) * m


def _lstm_head_kernel(gx0_ref, w_ih_ref, w_hh_ref, b_ref, w_lin_ref, b_lin_ref,
                      logits_ref, x_scratch, gx_scratch,
                      *, num_layers, seq_len, h_dim, bb):
    """Stacked-LSTM recurrence + final linear projection.

    gx0_ref:    [T, Bt, 4H]  layer-0 input-hidden gate preacts (precomputed,
                             gate order i,f,o,g; padded batch rows hold bias)
    w_ih_ref:   [L, H, 4H]   pre-transposed input-hidden weights (layer 0 unused)
    w_hh_ref:   [L, H, 4H]   pre-transposed recurrent weights
    b_ref:      [L, 1, 4H]   b_ih + b_hh (layer 0 unused)
    w_lin_ref:  [H, Op]      pre-transposed output projection
    b_lin_ref:  [1, Op]
    logits_ref: [Bt, Op]     lane-dense output store
    x_scratch:  [T, Bt, H]   inter-layer activation sequence
    gx_scratch: [T, Bt, 4H]  hoisted per-layer input-hidden gate preacts
    """
    four_h = 4 * h_dim
    h = None

    for layer in range(num_layers):                       # static layer loop
        if layer == 0:
            gx_src = gx0_ref                              # precomputed in wrapper
        else:
            # Hoisted input-hidden matmul + bias for the whole sequence.
            x_in = x_scratch[...].reshape(seq_len * bb, h_dim)
            gx = (jnp.dot(x_in, w_ih_ref[layer],
                          preferred_element_type=jnp.float32)
                  + b_ref[layer])
            gx_scratch[...] = gx.reshape(seq_len, bb, four_h)
            gx_src = gx_scratch

        last_layer = layer == num_layers - 1

        def step(t, carry, layer=layer, last_layer=last_layer, gx_src=gx_src):
            h, c = carry
            # Serial critical path: one [Bt,H]x[H,4H] MXU matmul + gate math.
            gates = (jnp.dot(h, w_hh_ref[layer],
                             preferred_element_type=jnp.float32)
                     + gx_src[t])
            # Gate order (i, f, o, g): 3 sigmoids in one EUP launch, 1 tanh.
            sig = jax.nn.sigmoid(gates[:, :3 * h_dim])
            i_g = sig[:, :h_dim]
            f_g = sig[:, h_dim:2 * h_dim]
            o_g = sig[:, 2 * h_dim:3 * h_dim]
            g_g = jnp.tanh(gates[:, 3 * h_dim:])
            c_new = f_g * c + i_g * g_g
            h_new = o_g * jnp.tanh(c_new)
            if not last_layer:
                # Safe: this layer's inputs were fully consumed by the hoist.
                x_scratch[t] = h_new
            return (h_new, c_new)

        unroll = True if seq_len <= 32 else 8
        h, _ = lax.fori_loop(
            0, seq_len, step,
            (jnp.zeros((bb, h_dim), jnp.float32),
             jnp.zeros((bb, h_dim), jnp.float32)),
            unroll=unroll)

    # h == lstm_output[:, -1, :] of the top layer; dropout is identity (eval).
    logits = (jnp.dot(h, w_lin_ref[...], preferred_element_type=jnp.float32)
              + b_lin_ref[...])
    logits_ref[...] = logits.astype(logits_ref.dtype)


def prepare_params(params, *, hidden_dim, output_dim):
    """One-time weight prep: transpose, gate-reorder (i,f,g,o -> i,f,o,g),
    fuse biases, and lane-pad only the final linear's output dim."""
    f32 = jnp.float32
    H = hidden_dim
    OP = _round_up(max(output_dim, 128), 128)
    perm = jnp.array([0, 1, 3, 2])          # i,f,g,o -> i,f,o,g

    def prep_w(w):                          # [L, 4H, in] -> [L, in, 4H]
        L, _, in_dim = w.shape
        wt = jnp.transpose(w.astype(f32), (0, 2, 1)).reshape(L, in_dim, 4, H)
        return wt[:, :, perm, :].reshape(L, in_dim, 4 * H)

    def prep_b(b):                          # [L, 4H] -> [L, 1, 4H]
        L = b.shape[0]
        bt = b.astype(f32).reshape(L, 4, H)[:, perm, :]
        return bt.reshape(L, 1, 4 * H)

    w_lin = jnp.zeros((H, OP), f32).at[:, :output_dim].set(
        params["w_lin"].astype(f32).T)
    b_lin = jnp.zeros((1, OP), f32).at[0, :output_dim].set(
        params["b_lin"].astype(f32))

    return {
        "embedding": params["embedding"].astype(f32),
        "w_ih": prep_w(params["w_ih"]),
        "w_hh": prep_w(params["w_hh"]),
        "b": prep_b(params["b_ih"] + params["b_hh"]),
        "w_lin": w_lin,
        "b_lin": b_lin,
    }


def custom_sa_forward(tokenized_ids, prepared, *, hidden_dim, output_dim,
                      num_layers, labels=None):
    """JAX wrapper reproducing CustomSaModel.forward (eval mode)."""
    emb_table = prepared["embedding"]                   # [V, E]
    B, T = tokenized_ids.shape
    E = emb_table.shape[1]
    H = hidden_dim
    assert E == H, "this kernel stacks per-layer weights, requires E == H"
    assert H % 8 == 0, "hidden_dim must be a multiple of 8 (f32 sublane tile)"
    assert num_layers >= 1

    four_h = 4 * H
    OP = prepared["w_lin"].shape[1]
    f32 = jnp.float32

    # Batch padding / tiling: sublane-pad to 8, tile across a parallel grid
    # axis (megacore on v7x) once the batch exceeds one 128-row tile.
    BP = _round_up(max(B, 8), 8)
    b_tile = BP if BP <= 128 else 128
    BP = _round_up(BP, b_tile)
    num_b_tiles = BP // b_tile

    # --- glue: embedding gather fused with layer-0 input-hidden projection ---
    emb = jnp.take(emb_table, tokenized_ids, axis=0)    # [B, T, E]
    emb_tm = jnp.transpose(emb, (1, 0, 2))              # [T, B, E]
    gx0 = jnp.einsum("tbe,eg->tbg", emb_tm, prepared["w_ih"][0]) \
        + prepared["b"][0]                              # [T, B, 4H]
    gx0_pad = jnp.zeros((T, BP, four_h), f32).at[:, :B, :].set(gx0)

    kernel = functools.partial(
        _lstm_head_kernel,
        num_layers=num_layers, seq_len=T, h_dim=H, bb=b_tile)

    L = num_layers
    logits_pad = pl.pallas_call(
        kernel,
        out_shape=jax.ShapeDtypeStruct((BP, OP), f32),
        grid=(num_b_tiles,),
        in_specs=[
            pl.BlockSpec((T, b_tile, four_h), lambda i: (0, i, 0)),
            pl.BlockSpec((L, H, four_h), lambda i: (0, 0, 0)),
            pl.BlockSpec((L, H, four_h), lambda i: (0, 0, 0)),
            pl.BlockSpec((L, 1, four_h), lambda i: (0, 0, 0)),
            pl.BlockSpec((H, OP), lambda i: (0, 0)),
            pl.BlockSpec((1, OP), lambda i: (0, 0)),
        ],
        out_specs=pl.BlockSpec((b_tile, OP), lambda i: (i, 0)),
        scratch_shapes=[
            pltpu.VMEM((T, b_tile, H), f32),        # inter-layer sequence
            pltpu.VMEM((T, b_tile, four_h), f32),   # hoisted gate preacts
        ],
        compiler_params=pltpu.CompilerParams(
            dimension_semantics=("parallel",)),
    )(gx0_pad, prepared["w_ih"], prepared["w_hh"], prepared["b"],
      prepared["w_lin"], prepared["b_lin"])

    logits = logits_pad[:B, :output_dim]

    loss = None
    if labels is not None:
        # nn.CrossEntropyLoss (mean reduction) -- plain-JAX glue.
        lse = jax.scipy.special.logsumexp(logits, axis=-1)
        picked = jnp.take_along_axis(logits, labels[:, None], axis=-1)[:, 0]
        loss = jnp.mean(lse - picked)
    return loss, logits


def init_params(key, *, vocab_size, embedding_dim, hidden_dim, output_dim,
                num_layers):
    """Deterministic parameter init mirroring the PyTorch module's shapes."""
    ks = jax.random.split(key, 8)
    H = hidden_dim
    k_lstm = 1.0 / jnp.sqrt(H)
    k_lin = 1.0 / jnp.sqrt(H)
    u = lambda k, shape, bound: jax.random.uniform(
        k, shape, jnp.float32, -bound, bound)
    return {
        "embedding": jax.random.normal(
            ks[0], (vocab_size, embedding_dim), jnp.float32),
        # layer 0 input size == embedding_dim == hidden_dim, so stackable.
        "w_ih": u(ks[1], (num_layers, 4 * H, embedding_dim), k_lstm),
        "w_hh": u(ks[2], (num_layers, 4 * H, H), k_lstm),
        "b_ih": u(ks[3], (num_layers, 4 * H), k_lstm),
        "b_hh": u(ks[4], (num_layers, 4 * H), k_lstm),
        "w_lin": u(ks[5], (output_dim, H), k_lin),
        "b_lin": u(ks[6], (output_dim,), k_lin),
    }


if __name__ == "__main__":
    # Small config consistent with the module's constructor.
    hidden_dim = 32
    output_dim = 4
    vocab_size = 100
    embedding_dim = 32
    num_layers = 2
    # dropout_rate = 0.1  # identity in eval mode
    batch, seq = 2, 8

    key = jax.random.PRNGKey(0)
    k_params, k_ids, k_lbl = jax.random.split(key, 3)

    params = init_params(
        k_params, vocab_size=vocab_size, embedding_dim=embedding_dim,
        hidden_dim=hidden_dim, output_dim=output_dim, num_layers=num_layers)

    # One-time weight prep (transpose, gate reorder, bias fuse, lane-pad head).
    prepared = prepare_params(
        params, hidden_dim=hidden_dim, output_dim=output_dim)
    prepared = jax.tree_util.tree_map(jax.block_until_ready, prepared)

    tokenized_ids = jax.random.randint(
        k_ids, (batch, seq), 0, vocab_size, dtype=jnp.int32)
    labels = jax.random.randint(
        k_lbl, (batch,), 0, output_dim, dtype=jnp.int32)

    loss, logits = custom_sa_forward(
        tokenized_ids, prepared,
        hidden_dim=hidden_dim, output_dim=output_dim,
        num_layers=num_layers, labels=labels)

    jax.block_until_ready(logits)
    jax.block_until_ready(loss)
    assert logits.shape == (batch, output_dim)
    print("KERNEL_OK")
</pallas_src>

<mosaic_0001>
module attributes {stable_mosaic.version = 11 : i64} {
  func.func @_lstm_head_kernel(%arg0: i32, %arg1: memref<8x8x128xf32, #tpu.memory_space<vmem>>, %arg2: memref<2x32x128xf32, #tpu.memory_space<vmem>>, %arg3: memref<2x32x128xf32, #tpu.memory_space<vmem>>, %arg4: memref<2x1x128xf32, #tpu.memory_space<vmem>>, %arg5: memref<32x128xf32, #tpu.memory_space<vmem>>, %arg6: memref<1x128xf32, #tpu.memory_space<vmem>>, %arg7: memref<8x128xf32, #tpu.memory_space<vmem>>, %arg8: memref<8x8x32xf32, #tpu.memory_space<vmem>>, %arg9: memref<8x8x128xf32, #tpu.memory_space<vmem>>) attributes {dimension_semantics = [#tpu.dimension_semantics<parallel>], iteration_bounds = array<i64: 1>, scalar_prefetch = 0 : i64, scratch_operands = 2 : i64, tpu.core_type = #tpu.core_type<tc>, window_params = [{transform_indices = @transform_0, window_bounds = array<i64: 8, 8, 128>}, {pipeline_mode = #tpu.pipeline_mode<synchronous>, transform_indices = @transform_1, window_bounds = array<i64: 2, 32, 128>}, {pipeline_mode = #tpu.pipeline_mode<synchronous>, transform_indices = @transform_2, window_bounds = array<i64: 2, 32, 128>}, {pipeline_mode = #tpu.pipeline_mode<synchronous>, transform_indices = @transform_3, window_bounds = array<i64: 2, 1, 128>}, {pipeline_mode = #tpu.pipeline_mode<synchronous>, transform_indices = @transform_4, window_bounds = array<i64: 32, 128>}, {pipeline_mode = #tpu.pipeline_mode<synchronous>, transform_indices = @transform_5, window_bounds = array<i64: 1, 128>}, {transform_indices = @transform_6, window_bounds = array<i64: 8, 128>}]} {
    %cst = arith.constant 0.000000e+00 : f32
    %0 = vector.broadcast %cst : f32 to vector<8x32xf32>
    %cst_0 = arith.constant 0.000000e+00 : f32
    %1 = vector.broadcast %cst_0 : f32 to vector<8x32xf32>
    %c0_i32 = arith.constant 0 : i32
    %c0 = arith.constant 0 : index
    %c0_1 = arith.constant 0 : index
    %c0_2 = arith.constant 0 : index
    %2 = vector.load %arg3[%c0, %c0_1, %c0_2] : memref<2x32x128xf32, #tpu.memory_space<vmem>>, vector<1x32x128xf32>
    %3 = vector.shape_cast %2 : vector<1x32x128xf32> to vector<32x128xf32>
    %cst_3 = arith.constant dense<0.000000e+00> : vector<8x128xf32>
    %4 = tpu.matmul %0, %3, %cst_3 {dimension_numbers = #tpu.dot_dimension_numbers<[1], [0], [0], [1], [0, 0, 1, 1], [], []>} : vector<8x32xf32>, vector<32x128xf32>, vector<8x128xf32> -> vector<8x128xf32>
    %5 = arith.index_cast %c0_i32 : i32 to index
    %c0_4 = arith.constant 0 : index
    %c0_5 = arith.constant 0 : index
    %6 = vector.load %arg1[%5, %c0_4, %c0_5] : memref<8x8x128xf32, #tpu.memory_space<vmem>>, vector<1x8x128xf32>
    %7 = vector.shape_cast %6 : vector<1x8x128xf32> to vector<8x128xf32>
    %8 = arith.addf %4, %7 : vector<8x128xf32>
    %9 = vector.extract_strided_slice %8 {offsets = [0, 0], sizes = [8, 96], strides = [1, 1]} : vector<8x128xf32> to vector<8x96xf32>
    %10 = arith.negf %9 : vector<8x96xf32>
    %11 = math.exp %10 : vector<8x96xf32>
    %cst_6 = arith.constant 1.000000e+00 : f32
    %12 = vector.broadcast %cst_6 : f32 to vector<8x96xf32>
    %13 = arith.addf %12, %11 : vector<8x96xf32>
    %14 = arith.divf %12, %13 : vector<8x96xf32>
    %15 = vector.extract_strided_slice %14 {offsets = [0, 0], sizes = [8, 32], strides = [1, 1]} : vector<8x96xf32> to vector<8x32xf32>
    %16 = vector.extract_strided_slice %14 {offsets = [0, 32], sizes = [8, 32], strides = [1, 1]} : vector<8x96xf32> to vector<8x32xf32>
    %17 = vector.extract_strided_slice %14 {offsets = [0, 64], sizes = [8, 32], strides = [1, 1]} : vector<8x96xf32> to vector<8x32xf32>
    %18 = vector.extract_strided_slice %8 {offsets = [0, 96], sizes = [8, 32], strides = [1, 1]} : vector<8x128xf32> to vector<8x32xf32>
    %19 = math.tanh %18 : vector<8x32xf32>
    %20 = arith.mulf %16, %1 : vector<8x32xf32>
    %21 = arith.mulf %15, %19 : vector<8x32xf32>
    %22 = arith.addf %20, %21 : vector<8x32xf32>
    %23 = math.tanh %22 : vector<8x32xf32>
    %24 = arith.mulf %17, %23 : vector<8x32xf32>
    %25 = arith.index_cast %c0_i32 : i32 to index
    %c0_7 = arith.constant 0 : index
    %c0_8 = arith.constant 0 : index
    %26 = vector.load %arg8[%25, %c0_7, %c0_8] : memref<8x8x32xf32, #tpu.memory_space<vmem>>, vector<1x8x32xf32>
    %27 = vector.shape_cast %26 : vector<1x8x32xf32> to vector<8x32xf32>
    %28 = vector.shape_cast %24 : vector<8x32xf32> to vector<1x8x32xf32>
    tpu.vector_store %arg8[%25, %c0_7, %c0_8], %28 {strides = array<i32>} : memref<8x8x32xf32, #tpu.memory_space<vmem>>, vector<1x8x32xf32>,
    %c1_i32 = arith.constant 1 : i32
    %c0_9 = arith.constant 0 : index
    %c0_10 = arith.constant 0 : index
    %c0_11 = arith.constant 0 : index
    %29 = vector.load %arg3[%c0_9, %c0_10, %c0_11] : memref<2x32x128xf32, #tpu.memory_space<vmem>>, vector<1x32x128xf32>
    %30 = vector.shape_cast %29 : vector<1x32x128xf32> to vector<32x128xf32>
    %cst_12 = arith.constant dense<0.000000e+00> : vector<8x128xf32>
    %31 = tpu.matmul %24, %30, %cst_12 {dimension_numbers = #tpu.dot_dimension_numbers<[1], [0], [0], [1], [0, 0, 1, 1], [], []>} : vector<8x32xf32>, vector<32x128xf32>, vector<8x128xf32> -> vector<8x128xf32>
    %32 = arith.index_cast %c1_i32 : i32 to index
    %c0_13 = arith.constant 0 : index
    %c0_14 = arith.constant 0 : index
    %33 = vector.load %arg1[%32, %c0_13, %c0_14] : memref<8x8x128xf32, #tpu.memory_space<vmem>>, vector<1x8x128xf32>
    %34 = vector.shape_cast %33 : vector<1x8x128xf32> to vector<8x128xf32>
    %35 = arith.addf %31, %34 : vector<8x128xf32>
    %36 = vector.extract_strided_slice %35 {offsets = [0, 0], sizes = [8, 96], strides = [1, 1]} : vector<8x128xf32> to vector<8x96xf32>
    %37 = arith.negf %36 : vector<8x96xf32>
    %38 = math.exp %37 : vector<8x96xf32>
    %cst_15 = arith.constant 1.000000e+00 : f32
    %39 = vector.broadcast %cst_15 : f32 to vector<8x96xf32>
    %40 = arith.addf %39, %38 : vector<8x96xf32>
    %41 = arith.divf %39, %40 : vector<8x96xf32>
    %42 = vector.extract_strided_slice %41 {offsets = [0, 0], sizes = [8, 32], strides = [1, 1]} : vector<8x96xf32> to vector<8x32xf32>
    %43 = vector.extract_strided_slice %41 {offsets = [0, 32], sizes = [8, 32], strides = [1, 1]} : vector<8x96xf32> to vector<8x32xf32>
    %44 = vector.extract_strided_slice %41 {offsets = [0, 64], sizes = [8, 32], strides = [1, 1]} : vector<8x96xf32> to vector<8x32xf32>
    %45 = vector.extract_strided_slice %35 {offsets = [0, 96], sizes = [8, 32], strides = [1, 1]} : vector<8x128xf32> to vector<8x32xf32>
    %46 = math.tanh %45 : vector<8x32xf32>
    %47 = arith.mulf %43, %22 : vector<8x32xf32>
    %48 = arith.mulf %42, %46 : vector<8x32xf32>
    %49 = arith.addf %47, %48 : vector<8x32xf32>
    %50 = math.tanh %49 : vector<8x32xf32>
    %51 = arith.mulf %44, %50 : vector<8x32xf32>
    %52 = arith.index_cast %c1_i32 : i32 to index
    %c0_16 = arith.constant 0 : index
    %c0_17 = arith.constant 0 : index
    %53 = vector.load %arg8[%52, %c0_16, %c0_17] : memref<8x8x32xf32, #tpu.memory_space<vmem>>, vector<1x8x32xf32>
    %54 = vector.shape_cast %53 : vector<1x8x32xf32> to vector<8x32xf32>
    %55 = vector.shape_cast %51 : vector<8x32xf32> to vector<1x8x32xf32>
    tpu.vector_store %arg8[%52, %c0_16, %c0_17], %55 {strides = array<i32>} : memref<8x8x32xf32, #tpu.memory_space<vmem>>, vector<1x8x32xf32>,
    %c2_i32 = arith.constant 2 : i32
    %c0_18 = arith.constant 0 : index
    %c0_19 = arith.constant 0 : index
    %c0_20 = arith.constant 0 : index
    %56 = vector.load %arg3[%c0_18, %c0_19, %c0_20] : memref<2x32x128xf32, #tpu.memory_space<vmem>>, vector<1x32x128xf32>
    %57 = vector.shape_cast %56 : vector<1x32x128xf32> to vector<32x128xf32>
    %cst_21 = arith.constant dense<0.000000e+00> : vector<8x128xf32>
    %58 = tpu.matmul %51, %57, %cst_21 {dimension_numbers = #tpu.dot_dimension_numbers<[1], [0], [0], [1], [0, 0, 1, 1], [], []>} : vector<8x32xf32>, vector<32x128xf32>, vector<8x128xf32> -> vector<8x128xf32>
    %59 = arith.index_cast %c2_i32 : i32 to index
    %c0_22 = arith.constant 0 : index
    %c0_23 = arith.constant 0 : index
    %60 = vector.load %arg1[%59, %c0_22, %c0_23] : memref<8x8x128xf32, #tpu.memory_space<vmem>>, vector<1x8x128xf32>
    %61 = vector.shape_cast %60 : vector<1x8x128xf32> to vector<8x128xf32>
    %62 = arith.addf %58, %61 : vector<8x128xf32>
    %63 = vector.extract_strided_slice %62 {offsets = [0, 0], sizes = [8, 96], strides = [1, 1]} : vector<8x128xf32> to vector<8x96xf32>
    %64 = arith.negf %63 : vector<8x96xf32>
    %65 = math.exp %64 : vector<8x96xf32>
    %cst_24 = arith.constant 1.000000e+00 : f32
    %66 = vector.broadcast %cst_24 : f32 to vector<8x96xf32>
    %67 = arith.addf %66, %65 : vector<8x96xf32>
    %68 = arith.divf %66, %67 : vector<8x96xf32>
    %69 = vector.extract_strided_slice %68 {offsets = [0, 0], sizes = [8, 32], strides = [1, 1]} : vector<8x96xf32> to vector<8x32xf32>
    %70 = vector.extract_strided_slice %68 {offsets = [0, 32], sizes = [8, 32], strides = [1, 1]} : vector<8x96xf32> to vector<8x32xf32>
    %71 = vector.extract_strided_slice %68 {offsets = [0, 64], sizes = [8, 32], strides = [1, 1]} : vector<8x96xf32> to vector<8x32xf32>
    %72 = vector.extract_strided_slice %62 {offsets = [0, 96], sizes = [8, 32], strides = [1, 1]} : vector<8x128xf32> to vector<8x32xf32>
    %73 = math.tanh %72 : vector<8x32xf32>
    %74 = arith.mulf %70, %49 : vector<8x32xf32>
    %75 = arith.mulf %69, %73 : vector<8x32xf32>
    %76 = arith.addf %74, %75 : vector<8x32xf32>
    %77 = math.tanh %76 : vector<8x32xf32>
    %78 = arith.mulf %71, %77 : vector<8x32xf32>
    %79 = arith.index_cast %c2_i32 : i32 to index
    %c0_25 = arith.constant 0 : index
    %c0_26 = arith.constant 0 : index
    %80 = vector.load %arg8[%79, %c0_25, %c0_26] : memref<8x8x32xf32, #tpu.memory_space<vmem>>, vector<1x8x32xf32>
    %81 = vector.shape_cast %80 : vector<1x8x32xf32> to vector<8x32xf32>
    %82 = vector.shape_cast %78 : vector<8x32xf32> to vector<1x8x32xf32>
    tpu.vector_store %arg8[%79, %c0_25, %c0_26], %82 {strides = array<i32>} : memref<8x8x32xf32, #tpu.memory_space<vmem>>, vector<1x8x32xf32>,
    %c3_i32 = arith.constant 3 : i32
    %c0_27 = arith.constant 0 : index
    %c0_28 = arith.constant 0 : index
    %c0_29 = arith.constant 0 : index
    %83 = vector.load %arg3[%c0_27, %c0_28, %c0_29] : memref<2x32x128xf32, #tpu.memory_space<vmem>>, vector<1x32x128xf32>
    %84 = vector.shape_cast %83 : vector<1x32x128xf32> to vector<32x128xf32>
    %cst_30 = arith.constant dense<0.000000e+00> : vector<8x128xf32>
    %85 = tpu.matmul %78, %84, %cst_30 {dimension_numbers = #tpu.dot_dimension_numbers<[1], [0], [0], [1], [0, 0, 1, 1], [], []>} : vector<8x32xf32>, vector<32x128xf32>, vector<8x128xf32> -> vector<8x128xf32>
    %86 = arith.index_cast %c3_i32 : i32 to index
    %c0_31 = arith.constant 0 : index
    %c0_32 = arith.constant 0 : index
    %87 = vector.load %arg1[%86, %c0_31, %c0_32] : memref<8x8x128xf32, #tpu.memory_space<vmem>>, vector<1x8x128xf32>
    %88 = vector.shape_cast %87 : vector<1x8x128xf32> to vector<8x128xf32>
    %89 = arith.addf %85, %88 : vector<8x128xf32>
    %90 = vector.extract_strided_slice %89 {offsets = [0, 0], sizes = [8, 96], strides = [1, 1]} : vector<8x128xf32> to vector<8x96xf32>
    %91 = arith.negf %90 : vector<8x96xf32>
    %92 = math.exp %91 : vector<8x96xf32>
    %cst_33 = arith.constant 1.000000e+00 : f32
    %93 = vector.broadcast %cst_33 : f32 to vector<8x96xf32>
    %94 = arith.addf %93, %92 : vector<8x96xf32>
    %95 = arith.divf %93, %94 : vector<8x96xf32>
    %96 = vector.extract_strided_slice %95 {offsets = [0, 0], sizes = [8, 32], strides = [1, 1]} : vector<8x96xf32> to vector<8x32xf32>
    %97 = vector.extract_strided_slice %95 {offsets = [0, 32], sizes = [8, 32], strides = [1, 1]} : vector<8x96xf32> to vector<8x32xf32>
    %98 = vector.extract_strided_slice %95 {offsets = [0, 64], sizes = [8, 32], strides = [1, 1]} : vector<8x96xf32> to vector<8x32xf32>
    %99 = vector.extract_strided_slice %89 {offsets = [0, 96], sizes = [8, 32], strides = [1, 1]} : vector<8x128xf32> to vector<8x32xf32>
    %100 = math.tanh %99 : vector<8x32xf32>
    %101 = arith.mulf %97, %76 : vector<8x32xf32>
    %102 = arith.mulf %96, %100 : vector<8x32xf32>
    %103 = arith.addf %101, %102 : vector<8x32xf32>
    %104 = math.tanh %103 : vector<8x32xf32>
    %105 = arith.mulf %98, %104 : vector<8x32xf32>
    %106 = arith.index_cast %c3_i32 : i32 to index
    %c0_34 = arith.constant 0 : index
    %c0_35 = arith.constant 0 : index
    %107 = vector.load %arg8[%106, %c0_34, %c0_35] : memref<8x8x32xf32, #tpu.memory_space<vmem>>, vector<1x8x32xf32>
    %108 = vector.shape_cast %107 : vector<1x8x32xf32> to vector<8x32xf32>
    %109 = vector.shape_cast %105 : vector<8x32xf32> to vector<1x8x32xf32>
    tpu.vector_store %arg8[%106, %c0_34, %c0_35], %109 {strides = array<i32>} : memref<8x8x32xf32, #tpu.memory_space<vmem>>, vector<1x8x32xf32>,
    %c4_i32 = arith.constant 4 : i32
    %c0_36 = arith.constant 0 : index
    %c0_37 = arith.constant 0 : index
    %c0_38 = arith.constant 0 : index
    %110 = vector.load %arg3[%c0_36, %c0_37, %c0_38] : memref<2x32x128xf32, #tpu.memory_space<vmem>>, vector<1x32x128xf32>
    %111 = vector.shape_cast %110 : vector<1x32x128xf32> to vector<32x128xf32>
    %cst_39 = arith.constant dense<0.000000e+00> : vector<8x128xf32>
    %112 = tpu.matmul %105, %111, %cst_39 {dimension_numbers = #tpu.dot_dimension_numbers<[1], [0], [0], [1], [0, 0, 1, 1], [], []>} : vector<8x32xf32>, vector<32x128xf32>, vector<8x128xf32> -> vector<8x128xf32>
    %113 = arith.index_cast %c4_i32 : i32 to index
    %c0_40 = arith.constant 0 : index
    %c0_41 = arith.constant 0 : index
    %114 = vector.load %arg1[%113, %c0_40, %c0_41] : memref<8x8x128xf32, #tpu.memory_space<vmem>>, vector<1x8x128xf32>
    %115 = vector.shape_cast %114 : vector<1x8x128xf32> to vector<8x128xf32>
    %116 = arith.addf %112, %115 : vector<8x128xf32>
    %117 = vector.extract_strided_slice %116 {offsets = [0, 0], sizes = [8, 96], strides = [1, 1]} : vector<8x128xf32> to vector<8x96xf32>
    %118 = arith.negf %117 : vector<8x96xf32>
    %119 = math.exp %118 : vector<8x96xf32>
    %cst_42 = arith.constant 1.000000e+00 : f32
    %120 = vector.broadcast %cst_42 : f32 to vector<8x96xf32>
    %121 = arith.addf %120, %119 : vector<8x96xf32>
    %122 = arith.divf %120, %121 : vector<8x96xf32>
    %123 = vector.extract_strided_slice %122 {offsets = [0, 0], sizes = [8, 32], strides = [1, 1]} : vector<8x96xf32> to vector<8x32xf32>
    %124 = vector.extract_strided_slice %122 {offsets = [0, 32], sizes = [8, 32], strides = [1, 1]} : vector<8x96xf32> to vector<8x32xf32>
    %125 = vector.extract_strided_slice %122 {offsets = [0, 64], sizes = [8, 32], strides = [1, 1]} : vector<8x96xf32> to vector<8x32xf32>
    %126 = vector.extract_strided_slice %116 {offsets = [0, 96], sizes = [8, 32], strides = [1, 1]} : vector<8x128xf32> to vector<8x32xf32>
    %127 = math.tanh %126 : vector<8x32xf32>
    %128 = arith.mulf %124, %103 : vector<8x32xf32>
    %129 = arith.mulf %123, %127 : vector<8x32xf32>
    %130 = arith.addf %128, %129 : vector<8x32xf32>
    %131 = math.tanh %130 : vector<8x32xf32>
    %132 = arith.mulf %125, %131 : vector<8x32xf32>
    %133 = arith.index_cast %c4_i32 : i32 to index
    %c0_43 = arith.constant 0 : index
    %c0_44 = arith.constant 0 : index
    %134 = vector.load %arg8[%133, %c0_43, %c0_44] : memref<8x8x32xf32, #tpu.memory_space<vmem>>, vector<1x8x32xf32>
    %135 = vector.shape_cast %134 : vector<1x8x32xf32> to vector<8x32xf32>
    %136 = vector.shape_cast %132 : vector<8x32xf32> to vector<1x8x32xf32>
    tpu.vector_store %arg8[%133, %c0_43, %c0_44], %136 {strides = array<i32>} : memref<8x8x32xf32, #tpu.memory_space<vmem>>, vector<1x8x32xf32>,
    %c5_i32 = arith.constant 5 : i32
    %c0_45 = arith.constant 0 : index
    %c0_46 = arith.constant 0 : index
    %c0_47 = arith.constant 0 : index
    %137 = vector.load %arg3[%c0_45, %c0_46, %c0_47] : memref<2x32x128xf32, #tpu.memory_space<vmem>>, vector<1x32x128xf32>
    %138 = vector.shape_cast %137 : vector<1x32x128xf32> to vector<32x128xf32>
    %cst_48 = arith.constant dense<0.000000e+00> : vector<8x128xf32>
    %139 = tpu.matmul %132, %138, %cst_48 {dimension_numbers = #tpu.dot_dimension_numbers<[1], [0], [0], [1], [0, 0, 1, 1], [], []>} : vector<8x32xf32>, vector<32x128xf32>, vector<8x128xf32> -> vector<8x128xf32>
    %140 = arith.index_cast %c5_i32 : i32 to index
    %c0_49 = arith.constant 0 : index
    %c0_50 = arith.constant 0 : index
    %141 = vector.load %arg1[%140, %c0_49, %c0_50] : memref<8x8x128xf32, #tpu.memory_space<vmem>>, vector<1x8x128xf32>
    %142 = vector.shape_cast %141 : vector<1x8x128xf32> to vector<8x128xf32>
    %143 = arith.addf %139, %142 : vector<8x128xf32>
    %144 = vector.extract_strided_slice %143 {offsets = [0, 0], sizes = [8, 96], strides = [1, 1]} : vector<8x128xf32> to vector<8x96xf32>
    %145 = arith.negf %144 : vector<8x96xf32>
    %146 = math.exp %145 : vector<8x96xf32>
    %cst_51 = arith.constant 1.000000e+00 : f32
    %147 = vector.broadcast %cst_51 : f32 to vector<8x96xf32>
    %148 = arith.addf %147, %146 : vector<8x96xf32>
    %149 = arith.divf %147, %148 : vector<8x96xf32>
    %150 = vector.extract_strided_slice %149 {offsets = [0, 0], sizes = [8, 32], strides = [1, 1]} : vector<8x96xf32> to vector<8x32xf32>
    %151 = vector.extract_strided_slice %149 {offsets = [0, 32], sizes = [8, 32], strides = [1, 1]} : vector<8x96xf32> to vector<8x32xf32>
    %152 = vector.extract_strided_slice %149 {offsets = [0, 64], sizes = [8, 32], strides = [1, 1]} : vector<8x96xf32> to vector<8x32xf32>
    %153 = vector.extract_strided_slice %143 {offsets = [0, 96], sizes = [8, 32], strides = [1, 1]} : vector<8x128xf32> to vector<8x32xf32>
    %154 = math.tanh %153 : vector<8x32xf32>
    %155 = arith.mulf %151, %130 : vector<8x32xf32>
    %156 = arith.mulf %150, %154 : vector<8x32xf32>
    %157 = arith.addf %155, %156 : vector<8x32xf32>
    %158 = math.tanh %157 : vector<8x32xf32>
    %159 = arith.mulf %152, %158 : vector<8x32xf32>
    %160 = arith.index_cast %c5_i32 : i32 to index
    %c0_52 = arith.constant 0 : index
    %c0_53 = arith.constant 0 : index
    %161 = vector.load %arg8[%160, %c0_52, %c0_53] : memref<8x8x32xf32, #tpu.memory_space<vmem>>, vector<1x8x32xf32>
    %162 = vector.shape_cast %161 : vector<1x8x32xf32> to vector<8x32xf32>
    %163 = vector.shape_cast %159 : vector<8x32xf32> to vector<1x8x32xf32>
    tpu.vector_store %arg8[%160, %c0_52, %c0_53], %163 {strides = array<i32>} : memref<8x8x32xf32, #tpu.memory_space<vmem>>, vector<1x8x32xf32>,
    %c6_i32 = arith.constant 6 : i32
    %c0_54 = arith.constant 0 : index
    %c0_55 = arith.constant 0 : index
    %c0_56 = arith.constant 0 : index
    %164 = vector.load %arg3[%c0_54, %c0_55, %c0_56] : memref<2x32x128xf32, #tpu.memory_space<vmem>>, vector<1x32x128xf32>
    %165 = vector.shape_cast %164 : vector<1x32x128xf32> to vector<32x128xf32>
    %cst_57 = arith.constant dense<0.000000e+00> : vector<8x128xf32>
    %166 = tpu.matmul %159, %165, %cst_57 {dimension_numbers = #tpu.dot_dimension_numbers<[1], [0], [0], [1], [0, 0, 1, 1], [], []>} : vector<8x32xf32>, vector<32x128xf32>, vector<8x128xf32> -> vector<8x128xf32>
    %167 = arith.index_cast %c6_i32 : i32 to index
    %c0_58 = arith.constant 0 : index
    %c0_59 = arith.constant 0 : index
    %168 = vector.load %arg1[%167, %c0_58, %c0_59] : memref<8x8x128xf32, #tpu.memory_space<vmem>>, vector<1x8x128xf32>
    %169 = vector.shape_cast %168 : vector<1x8x128xf32> to vector<8x128xf32>
    %170 = arith.addf %166, %169 : vector<8x128xf32>
    %171 = vector.extract_strided_slice %170 {offsets = [0, 0], sizes = [8, 96], strides = [1, 1]} : vector<8x128xf32> to vector<8x96xf32>
    %172 = arith.negf %171 : vector<8x96xf32>
    %173 = math.exp %172 : vector<8x96xf32>
    %cst_60 = arith.constant 1.000000e+00 : f32
    %174 = vector.broadcast %cst_60 : f32 to vector<8x96xf32>
    %175 = arith.addf %174, %173 : vector<8x96xf32>
    %176 = arith.divf %174, %175 : vector<8x96xf32>
    %177 = vector.extract_strided_slice %176 {offsets = [0, 0], sizes = [8, 32], strides = [1, 1]} : vector<8x96xf32> to vector<8x32xf32>
    %178 = vector.extract_strided_slice %176 {offsets = [0, 32], sizes = [8, 32], strides = [1, 1]} : vector<8x96xf32> to vector<8x32xf32>
    %179 = vector.extract_strided_slice %176 {offsets = [0, 64], sizes = [8, 32], strides = [1, 1]} : vector<8x96xf32> to vector<8x32xf32>
    %180 = vector.extract_strided_slice %170 {offsets = [0, 96], sizes = [8, 32], strides = [1, 1]} : vector<8x128xf32> to vector<8x32xf32>
    %181 = math.tanh %180 : vector<8x32xf32>
    %182 = arith.mulf %178, %157 : vector<8x32xf32>
    %183 = arith.mulf %177, %181 : vector<8x32xf32>
    %184 = arith.addf %182, %183 : vector<8x32xf32>
    %185 = math.tanh %184 : vector<8x32xf32>
    %186 = arith.mulf %179, %185 : vector<8x32xf32>
    %187 = arith.index_cast %c6_i32 : i32 to index
    %c0_61 = arith.constant 0 : index
    %c0_62 = arith.constant 0 : index
    %188 = vector.load %arg8[%187, %c0_61, %c0_62] : memref<8x8x32xf32, #tpu.memory_space<vmem>>, vector<1x8x32xf32>
    %189 = vector.shape_cast %188 : vector<1x8x32xf32> to vector<8x32xf32>
    %190 = vector.shape_cast %186 : vector<8x32xf32> to vector<1x8x32xf32>
    tpu.vector_store %arg8[%187, %c0_61, %c0_62], %190 {strides = array<i32>} : memref<8x8x32xf32, #tpu.memory_space<vmem>>, vector<1x8x32xf32>,
    %c7_i32 = arith.constant 7 : i32
    %c0_63 = arith.constant 0 : index
    %c0_64 = arith.constant 0 : index
    %c0_65 = arith.constant 0 : index
    %191 = vector.load %arg3[%c0_63, %c0_64, %c0_65] : memref<2x32x128xf32, #tpu.memory_space<vmem>>, vector<1x32x128xf32>
    %192 = vector.shape_cast %191 : vector<1x32x128xf32> to vector<32x128xf32>
    %cst_66 = arith.constant dense<0.000000e+00> : vector<8x128xf32>
    %193 = tpu.matmul %186, %192, %cst_66 {dimension_numbers = #tpu.dot_dimension_numbers<[1], [0], [0], [1], [0, 0, 1, 1], [], []>} : vector<8x32xf32>, vector<32x128xf32>, vector<8x128xf32> -> vector<8x128xf32>
    %194 = arith.index_cast %c7_i32 : i32 to index
    %c0_67 = arith.constant 0 : index
    %c0_68 = arith.constant 0 : index
    %195 = vector.load %arg1[%194, %c0_67, %c0_68] : memref<8x8x128xf32, #tpu.memory_space<vmem>>, vector<1x8x128xf32>
    %196 = vector.shape_cast %195 : vector<1x8x128xf32> to vector<8x128xf32>
    %197 = arith.addf %193, %196 : vector<8x128xf32>
    %198 = vector.extract_strided_slice %197 {offsets = [0, 0], sizes = [8, 96], strides = [1, 1]} : vector<8x128xf32> to vector<8x96xf32>
    %199 = arith.negf %198 : vector<8x96xf32>
    %200 = math.exp %199 : vector<8x96xf32>
    %cst_69 = arith.constant 1.000000e+00 : f32
    %201 = vector.broadcast %cst_69 : f32 to vector<8x96xf32>
    %202 = arith.addf %201, %200 : vector<8x96xf32>
    %203 = arith.divf %201, %202 : vector<8x96xf32>
    %204 = vector.extract_strided_slice %203 {offsets = [0, 0], sizes = [8, 32], strides = [1, 1]} : vector<8x96xf32> to vector<8x32xf32>
    %205 = vector.extract_strided_slice %203 {offsets = [0, 32], sizes = [8, 32], strides = [1, 1]} : vector<8x96xf32> to vector<8x32xf32>
    %206 = vector.extract_strided_slice %203 {offsets = [0, 64], sizes = [8, 32], strides = [1, 1]} : vector<8x96xf32> to vector<8x32xf32>
    %207 = vector.extract_strided_slice %197 {offsets = [0, 96], sizes = [8, 32], strides = [1, 1]} : vector<8x128xf32> to vector<8x32xf32>
    %208 = math.tanh %207 : vector<8x32xf32>
    %209 = arith.mulf %205, %184 : vector<8x32xf32>
    %210 = arith.mulf %204, %208 : vector<8x32xf32>
    %211 = arith.addf %209, %210 : vector<8x32xf32>
    %212 = math.tanh %211 : vector<8x32xf32>
    %213 = arith.mulf %206, %212 : vector<8x32xf32>
    %214 = arith.index_cast %c7_i32 : i32 to index
    %c0_70 = arith.constant 0 : index
    %c0_71 = arith.constant 0 : index
    %215 = vector.load %arg8[%214, %c0_70, %c0_71] : memref<8x8x32xf32, #tpu.memory_space<vmem>>, vector<1x8x32xf32>
    %216 = vector.shape_cast %215 : vector<1x8x32xf32> to vector<8x32xf32>
    %217 = vector.shape_cast %213 : vector<8x32xf32> to vector<1x8x32xf32>
    tpu.vector_store %arg8[%214, %c0_70, %c0_71], %217 {strides = array<i32>} : memref<8x8x32xf32, #tpu.memory_space<vmem>>, vector<1x8x32xf32>,
    %c8_i32 = arith.constant 8 : i32
    %c0_72 = arith.constant 0 : index
    %c0_73 = arith.constant 0 : index
    %c0_74 = arith.constant 0 : index
    %218 = vector.load %arg8[%c0_72, %c0_73, %c0_74] : memref<8x8x32xf32, #tpu.memory_space<vmem>>, vector<8x8x32xf32>
    %219 = vector.shape_cast %218 : vector<8x8x32xf32> to vector<64x32xf32>
    %c1 = arith.constant 1 : index
    %c0_75 = arith.constant 0 : index
    %c0_76 = arith.constant 0 : index
    %220 = vector.load %arg2[%c1, %c0_75, %c0_76] : memref<2x32x128xf32, #tpu.memory_space<vmem>>, vector<1x32x128xf32>
    %221 = vector.shape_cast %220 : vector<1x32x128xf32> to vector<32x128xf32>
    %cst_77 = arith.constant dense<0.000000e+00> : vector<64x128xf32>
    %222 = tpu.matmul %219, %221, %cst_77 {dimension_numbers = #tpu.dot_dimension_numbers<[1], [0], [0], [1], [0, 0, 1, 1], [], []>} : vector<64x32xf32>, vector<32x128xf32>, vector<64x128xf32> -> vector<64x128xf32>
    %c1_78 = arith.constant 1 : index
    %c0_79 = arith.constant 0 : index
    %c0_80 = arith.constant 0 : index
    %223 = vector.load %arg4[%c1_78, %c0_79, %c0_80] : memref<2x1x128xf32, #tpu.memory_space<vmem>>, vector<1x1x128xf32>
    %224 = vector.shape_cast %223 : vector<1x1x128xf32> to vector<1x128xf32>
    %225 = vector.broadcast %224 : vector<1x128xf32> to vector<64x128xf32>
    %226 = arith.addf %222, %225 : vector<64x128xf32>
    %227 = vector.shape_cast %226 : vector<64x128xf32> to vector<8x8x128xf32>
    %c0_81 = arith.constant 0 : index
    %c0_82 = arith.constant 0 : index
    %c0_83 = arith.constant 0 : index
    %228 = vector.load %arg9[%c0_81, %c0_82, %c0_83] : memref<8x8x128xf32, #tpu.memory_space<vmem>>, vector<8x8x128xf32>
    tpu.vector_store %arg9[%c0_81, %c0_82, %c0_83], %227 {strides = array<i32>} : memref<8x8x128xf32, #tpu.memory_space<vmem>>, vector<8x8x128xf32>,
    %cst_84 = arith.constant 0.000000e+00 : f32
    %229 = vector.broadcast %cst_84 : f32 to vector<8x32xf32>
    %cst_85 = arith.constant 0.000000e+00 : f32
    %230 = vector.broadcast %cst_85 : f32 to vector<8x32xf32>
    %c0_i32_86 = arith.constant 0 : i32
    %c1_87 = arith.constant 1 : index
    %c0_88 = arith.constant 0 : index
    %c0_89 = arith.constant 0 : index
    %231 = vector.load %arg3[%c1_87, %c0_88, %c0_89] : memref<2x32x128xf32, #tpu.memory_space<vmem>>, vector<1x32x128xf32>
    %232 = vector.shape_cast %231 : vector<1x32x128xf32> to vector<32x128xf32>
    %cst_90 = arith.constant dense<0.000000e+00> : vector<8x128xf32>
    %233 = tpu.matmul %229, %232, %cst_90 {dimension_numbers = #tpu.dot_dimension_numbers<[1], [0], [0], [1], [0, 0, 1, 1], [], []>} : vector<8x32xf32>, vector<32x128xf32>, vector<8x128xf32> -> vector<8x128xf32>
    %234 = arith.index_cast %c0_i32_86 : i32 to index
    %c0_91 = arith.constant 0 : index
    %c0_92 = arith.constant 0 : index
    %235 = vector.load %arg9[%234, %c0_91, %c0_92] : memref<8x8x128xf32, #tpu.memory_space<vmem>>, vector<1x8x128xf32>
    %236 = vector.shape_cast %235 : vector<1x8x128xf32> to vector<8x128xf32>
    %237 = arith.addf %233, %236 : vector<8x128xf32>
    %238 = vector.extract_strided_slice %237 {offsets = [0, 0], sizes = [8, 96], strides = [1, 1]} : vector<8x128xf32> to vector<8x96xf32>
    %239 = arith.negf %238 : vector<8x96xf32>
    %240 = math.exp %239 : vector<8x96xf32>
    %cst_93 = arith.constant 1.000000e+00 : f32
    %241 = vector.broadcast %cst_93 : f32 to vector<8x96xf32>
    %242 = arith.addf %241, %240 : vector<8x96xf32>
    %243 = arith.divf %241, %242 : vector<8x96xf32>
    %244 = vector.extract_strided_slice %243 {offsets = [0, 0], sizes = [8, 32], strides = [1, 1]} : vector<8x96xf32> to vector<8x32xf32>
    %245 = vector.extract_strided_slice %243 {offsets = [0, 32], sizes = [8, 32], strides = [1, 1]} : vector<8x96xf32> to vector<8x32xf32>
    %246 = vector.extract_strided_slice %243 {offsets = [0, 64], sizes = [8, 32], strides = [1, 1]} : vector<8x96xf32> to vector<8x32xf32>
    %247 = vector.extract_strided_slice %237 {offsets = [0, 96], sizes = [8, 32], strides = [1, 1]} : vector<8x128xf32> to vector<8x32xf32>
    %248 = math.tanh %247 : vector<8x32xf32>
    %249 = arith.mulf %245, %230 : vector<8x32xf32>
    %250 = arith.mulf %244, %248 : vector<8x32xf32>
    %251 = arith.addf %249, %250 : vector<8x32xf32>
    %252 = math.tanh %251 : vector<8x32xf32>
    %253 = arith.mulf %246, %252 : vector<8x32xf32>
    %c1_i32_94 = arith.constant 1 : i32
    %c1_95 = arith.constant 1 : index
    %c0_96 = arith.constant 0 : index
    %c0_97 = arith.constant 0 : index
    %254 = vector.load %arg3[%c1_95, %c0_96, %c0_97] : memref<2x32x128xf32, #tpu.memory_space<vmem>>, vector<1x32x128xf32>
    %255 = vector.shape_cast %254 : vector<1x32x128xf32> to vector<32x128xf32>
    %cst_98 = arith.constant dense<0.000000e+00> : vector<8x128xf32>
    %256 = tpu.matmul %253, %255, %cst_98 {dimension_numbers = #tpu.dot_dimension_numbers<[1], [0], [0], [1], [0, 0, 1, 1], [], []>} : vector<8x32xf32>, vector<32x128xf32>, vector<8x128xf32> -> vector<8x128xf32>
    %257 = arith.index_cast %c1_i32_94 : i32 to index
    %c0_99 = arith.constant 0 : index
    %c0_100 = arith.constant 0 : index
    %258 = vector.load %arg9[%257, %c0_99, %c0_100] : memref<8x8x128xf32, #tpu.memory_space<vmem>>, vector<1x8x128xf32>
    %259 = vector.shape_cast %258 : vector<1x8x128xf32> to vector<8x128xf32>
    %260 = arith.addf %256, %259 : vector<8x128xf32>
    %261 = vector.extract_strided_slice %260 {offsets = [0, 0], sizes = [8, 96], strides = [1, 1]} : vector<8x128xf32> to vector<8x96xf32>
    %262 = arith.negf %261 : vector<8x96xf32>
    %263 = math.exp %262 : vector<8x96xf32>
    %cst_101 = arith.constant 1.000000e+00 : f32
    %264 = vector.broadcast %cst_101 : f32 to vector<8x96xf32>
    %265 = arith.addf %264, %263 : vector<8x96xf32>
    %266 = arith.divf %264, %265 : vector<8x96xf32>
    %267 = vector.extract_strided_slice %266 {offsets = [0, 0], sizes = [8, 32], strides = [1, 1]} : vector<8x96xf32> to vector<8x32xf32>
    %268 = vector.extract_strided_slice %266 {offsets = [0, 32], sizes = [8, 32], strides = [1, 1]} : vector<8x96xf32> to vector<8x32xf32>
    %269 = vector.extract_strided_slice %266 {offsets = [0, 64], sizes = [8, 32], strides = [1, 1]} : vector<8x96xf32> to vector<8x32xf32>
    %270 = vector.extract_strided_slice %260 {offsets = [0, 96], sizes = [8, 32], strides = [1, 1]} : vector<8x128xf32> to vector<8x32xf32>
    %271 = math.tanh %270 : vector<8x32xf32>
    %272 = arith.mulf %268, %251 : vector<8x32xf32>
    %273 = arith.mulf %267, %271 : vector<8x32xf32>
    %274 = arith.addf %272, %273 : vector<8x32xf32>
    %275 = math.tanh %274 : vector<8x32xf32>
    %276 = arith.mulf %269, %275 : vector<8x32xf32>
    %c2_i32_102 = arith.constant 2 : i32
    %c1_103 = arith.constant 1 : index
    %c0_104 = arith.constant 0 : index
    %c0_105 = arith.constant 0 : index
    %277 = vector.load %arg3[%c1_103, %c0_104, %c0_105] : memref<2x32x128xf32, #tpu.memory_space<vmem>>, vector<1x32x128xf32>
    %278 = vector.shape_cast %277 : vector<1x32x128xf32> to vector<32x128xf32>
    %cst_106 = arith.constant dense<0.000000e+00> : vector<8x128xf32>
    %279 = tpu.matmul %276, %278, %cst_106 {dimension_numbers = #tpu.dot_dimension_numbers<[1], [0], [0], [1], [0, 0, 1, 1], [], []>} : vector<8x32xf32>, vector<32x128xf32>, vector<8x128xf32> -> vector<8x128xf32>
    %280 = arith.index_cast %c2_i32_102 : i32 to index
    %c0_107 = arith.constant 0 : index
    %c0_108 = arith.constant 0 : index
    %281 = vector.load %arg9[%280, %c0_107, %c0_108] : memref<8x8x128xf32, #tpu.memory_space<vmem>>, vector<1x8x128xf32>
    %282 = vector.shape_cast %281 : vector<1x8x128xf32> to vector<8x128xf32>
    %283 = arith.addf %279, %282 : vector<8x128xf32>
    %284 = vector.extract_strided_slice %283 {offsets = [0, 0], sizes = [8, 96], strides = [1, 1]} : vector<8x128xf32> to vector<8x96xf32>
    %285 = arith.negf %284 : vector<8x96xf32>
    %286 = math.exp %285 : vector<8x96xf32>
    %cst_109 = arith.constant 1.000000e+00 : f32
    %287 = vector.broadcast %cst_109 : f32 to vector<8x96xf32>
    %288 = arith.addf %287, %286 : vector<8x96xf32>
    %289 = arith.divf %287, %288 : vector<8x96xf32>
    %290 = vector.extract_strided_slice %289 {offsets = [0, 0], sizes = [8, 32], strides = [1, 1]} : vector<8x96xf32> to vector<8x32xf32>
    %291 = vector.extract_strided_slice %289 {offsets = [0, 32], sizes = [8, 32], strides = [1, 1]} : vector<8x96xf32> to vector<8x32xf32>
    %292 = vector.extract_strided_slice %289 {offsets = [0, 64], sizes = [8, 32], strides = [1, 1]} : vector<8x96xf32> to vector<8x32xf32>
    %293 = vector.extract_strided_slice %283 {offsets = [0, 96], sizes = [8, 32], strides = [1, 1]} : vector<8x128xf32> to vector<8x32xf32>
    %294 = math.tanh %293 : vector<8x32xf32>
    %295 = arith.mulf %291, %274 : vector<8x32xf32>
    %296 = arith.mulf %290, %294 : vector<8x32xf32>
    %297 = arith.addf %295, %296 : vector<8x32xf32>
    %298 = math.tanh %297 : vector<8x32xf32>
    %299 = arith.mulf %292, %298 : vector<8x32xf32>
    %c3_i32_110 = arith.constant 3 : i32
    %c1_111 = arith.constant 1 : index
    %c0_112 = arith.constant 0 : index
    %c0_113 = arith.constant 0 : index
    %300 = vector.load %arg3[%c1_111, %c0_112, %c0_113] : memref<2x32x128xf32, #tpu.memory_space<vmem>>, vector<1x32x128xf32>
    %301 = vector.shape_cast %300 : vector<1x32x128xf32> to vector<32x128xf32>
    %cst_114 = arith.constant dense<0.000000e+00> : vector<8x128xf32>
    %302 = tpu.matmul %299, %301, %cst_114 {dimension_numbers = #tpu.dot_dimension_numbers<[1], [0], [0], [1], [0, 0, 1, 1], [], []>} : vector<8x32xf32>, vector<32x128xf32>, vector<8x128xf32> -> vector<8x128xf32>
    %303 = arith.index_cast %c3_i32_110 : i32 to index
    %c0_115 = arith.constant 0 : index
    %c0_116 = arith.constant 0 : index
    %304 = vector.load %arg9[%303, %c0_115, %c0_116] : memref<8x8x128xf32, #tpu.memory_space<vmem>>, vector<1x8x128xf32>
    %305 = vector.shape_cast %304 : vector<1x8x128xf32> to vector<8x128xf32>
    %306 = arith.addf %302, %305 : vector<8x128xf32>
    %307 = vector.extract_strided_slice %306 {offsets = [0, 0], sizes = [8, 96], strides = [1, 1]} : vector<8x128xf32> to vector<8x96xf32>
    %308 = arith.negf %307 : vector<8x96xf32>
    %309 = math.exp %308 : vector<8x96xf32>
    %cst_117 = arith.constant 1.000000e+00 : f32
    %310 = vector.broadcast %cst_117 : f32 to vector<8x96xf32>
    %311 = arith.addf %310, %309 : vector<8x96xf32>
    %312 = arith.divf %310, %311 : vector<8x96xf32>
    %313 = vector.extract_strided_slice %312 {offsets = [0, 0], sizes = [8, 32], strides = [1, 1]} : vector<8x96xf32> to vector<8x32xf32>
    %314 = vector.extract_strided_slice %312 {offsets = [0, 32], sizes = [8, 32], strides = [1, 1]} : vector<8x96xf32> to vector<8x32xf32>
    %315 = vector.extract_strided_slice %312 {offsets = [0, 64], sizes = [8, 32], strides = [1, 1]} : vector<8x96xf32> to vector<8x32xf32>
    %316 = vector.extract_strided_slice %306 {offsets = [0, 96], sizes = [8, 32], strides = [1, 1]} : vector<8x128xf32> to vector<8x32xf32>
    %317 = math.tanh %316 : vector<8x32xf32>
    %318 = arith.mulf %314, %297 : vector<8x32xf32>
    %319 = arith.mulf %313, %317 : vector<8x32xf32>
    %320 = arith.addf %318, %319 : vector<8x32xf32>
    %321 = math.tanh %320 : vector<8x32xf32>
    %322 = arith.mulf %315, %321 : vector<8x32xf32>
    %c4_i32_118 = arith.constant 4 : i32
    %c1_119 = arith.constant 1 : index
    %c0_120 = arith.constant 0 : index
    %c0_121 = arith.constant 0 : index
    %323 = vector.load %arg3[%c1_119, %c0_120, %c0_121] : memref<2x32x128xf32, #tpu.memory_space<vmem>>, vector<1x32x128xf32>
    %324 = vector.shape_cast %323 : vector<1x32x128xf32> to vector<32x128xf32>
    %cst_122 = arith.constant dense<0.000000e+00> : vector<8x128xf32>
    %325 = tpu.matmul %322, %324, %cst_122 {dimension_numbers = #tpu.dot_dimension_numbers<[1], [0], [0], [1], [0, 0, 1, 1], [], []>} : vector<8x32xf32>, vector<32x128xf32>, vector<8x128xf32> -> vector<8x128xf32>
    %326 = arith.index_cast %c4_i32_118 : i32 to index
    %c0_123 = arith.constant 0 : index
    %c0_124 = arith.constant 0 : index
    %327 = vector.load %arg9[%326, %c0_123, %c0_124] : memref<8x8x128xf32, #tpu.memory_space<vmem>>, vector<1x8x128xf32>
    %328 = vector.shape_cast %327 : vector<1x8x128xf32> to vector<8x128xf32>
    %329 = arith.addf %325, %328 : vector<8x128xf32>
    %330 = vector.extract_strided_slice %329 {offsets = [0, 0], sizes = [8, 96], strides = [1, 1]} : vector<8x128xf32> to vector<8x96xf32>
    %331 = arith.negf %330 : vector<8x96xf32>
    %332 = math.exp %331 : vector<8x96xf32>
    %cst_125 = arith.constant 1.000000e+00 : f32
    %333 = vector.broadcast %cst_125 : f32 to vector<8x96xf32>
    %334 = arith.addf %333, %332 : vector<8x96xf32>
    %335 = arith.divf %333, %334 : vector<8x96xf32>
    %336 = vector.extract_strided_slice %335 {offsets = [0, 0], sizes = [8, 32], strides = [1, 1]} : vector<8x96xf32> to vector<8x32xf32>
    %337 = vector.extract_strided_slice %335 {offsets = [0, 32], sizes = [8, 32], strides = [1, 1]} : vector<8x96xf32> to vector<8x32xf32>
    %338 = vector.extract_strided_slice %335 {offsets = [0, 64], sizes = [8, 32], strides = [1, 1]} : vector<8x96xf32> to vector<8x32xf32>
    %339 = vector.extract_strided_slice %329 {offsets = [0, 96], sizes = [8, 32], strides = [1, 1]} : vector<8x128xf32> to vector<8x32xf32>
    %340 = math.tanh %339 : vector<8x32xf32>
    %341 = arith.mulf %337, %320 : vector<8x32xf32>
    %342 = arith.mulf %336, %340 : vector<8x32xf32>
    %343 = arith.addf %341, %342 : vector<8x32xf32>
    %344 = math.tanh %343 : vector<8x32xf32>
    %345 = arith.mulf %338, %344 : vector<8x32xf32>
    %c5_i32_126 = arith.constant 5 : i32
    %c1_127 = arith.constant 1 : index
    %c0_128 = arith.constant 0 : index
    %c0_129 = arith.constant 0 : index
    %346 = vector.load %arg3[%c1_127, %c0_128, %c0_129] : memref<2x32x128xf32, #tpu.memory_space<vmem>>, vector<1x32x128xf32>
    %347 = vector.shape_cast %346 : vector<1x32x128xf32> to vector<32x128xf32>
    %cst_130 = arith.constant dense<0.000000e+00> : vector<8x128xf32>
    %348 = tpu.matmul %345, %347, %cst_130 {dimension_numbers = #tpu.dot_dimension_numbers<[1], [0], [0], [1], [0, 0, 1, 1], [], []>} : vector<8x32xf32>, vector<32x128xf32>, vector<8x128xf32> -> vector<8x128xf32>
    %349 = arith.index_cast %c5_i32_126 : i32 to index
    %c0_131 = arith.constant 0 : index
    %c0_132 = arith.constant 0 : index
    %350 = vector.load %arg9[%349, %c0_131, %c0_132] : memref<8x8x128xf32, #tpu.memory_space<vmem>>, vector<1x8x128xf32>
    %351 = vector.shape_cast %350 : vector<1x8x128xf32> to vector<8x128xf32>
    %352 = arith.addf %348, %351 : vector<8x128xf32>
    %353 = vector.extract_strided_slice %352 {offsets = [0, 0], sizes = [8, 96], strides = [1, 1]} : vector<8x128xf32> to vector<8x96xf32>
    %354 = arith.negf %353 : vector<8x96xf32>
    %355 = math.exp %354 : vector<8x96xf32>
    %cst_133 = arith.constant 1.000000e+00 : f32
    %356 = vector.broadcast %cst_133 : f32 to vector<8x96xf32>
    %357 = arith.addf %356, %355 : vector<8x96xf32>
    %358 = arith.divf %356, %357 : vector<8x96xf32>
    %359 = vector.extract_strided_slice %358 {offsets = [0, 0], sizes = [8, 32], strides = [1, 1]} : vector<8x96xf32> to vector<8x32xf32>
    %360 = vector.extract_strided_slice %358 {offsets = [0, 32], sizes = [8, 32], strides = [1, 1]} : vector<8x96xf32> to vector<8x32xf32>
    %361 = vector.extract_strided_slice %358 {offsets = [0, 64], sizes = [8, 32], strides = [1, 1]} : vector<8x96xf32> to vector<8x32xf32>
    %362 = vector.extract_strided_slice %352 {offsets = [0, 96], sizes = [8, 32], strides = [1, 1]} : vector<8x128xf32> to vector<8x32xf32>
    %363 = math.tanh %362 : vector<8x32xf32>
    %364 = arith.mulf %360, %343 : vector<8x32xf32>
    %365 = arith.mulf %359, %363 : vector<8x32xf32>
    %366 = arith.addf %364, %365 : vector<8x32xf32>
    %367 = math.tanh %366 : vector<8x32xf32>
    %368 = arith.mulf %361, %367 : vector<8x32xf32>
    %c6_i32_134 = arith.constant 6 : i32
    %c1_135 = arith.constant 1 : index
    %c0_136 = arith.constant 0 : index
    %c0_137 = arith.constant 0 : index
    %369 = vector.load %arg3[%c1_135, %c0_136, %c0_137] : memref<2x32x128xf32, #tpu.memory_space<vmem>>, vector<1x32x128xf32>
    %370 = vector.shape_cast %369 : vector<1x32x128xf32> to vector<32x128xf32>
    %cst_138 = arith.constant dense<0.000000e+00> : vector<8x128xf32>
    %371 = tpu.matmul %368, %370, %cst_138 {dimension_numbers = #tpu.dot_dimension_numbers<[1], [0], [0], [1], [0, 0, 1, 1], [], []>} : vector<8x32xf32>, vector<32x128xf32>, vector<8x128xf32> -> vector<8x128xf32>
    %372 = arith.index_cast %c6_i32_134 : i32 to index
    %c0_139 = arith.constant 0 : index
    %c0_140 = arith.constant 0 : index
    %373 = vector.load %arg9[%372, %c0_139, %c0_140] : memref<8x8x128xf32, #tpu.memory_space<vmem>>, vector<1x8x128xf32>
    %374 = vector.shape_cast %373 : vector<1x8x128xf32> to vector<8x128xf32>
    %375 = arith.addf %371, %374 : vector<8x128xf32>
    %376 = vector.extract_strided_slice %375 {offsets = [0, 0], sizes = [8, 96], strides = [1, 1]} : vector<8x128xf32> to vector<8x96xf32>
    %377 = arith.negf %376 : vector<8x96xf32>
    %378 = math.exp %377 : vector<8x96xf32>
    %cst_141 = arith.constant 1.000000e+00 : f32
    %379 = vector.broadcast %cst_141 : f32 to vector<8x96xf32>
    %380 = arith.addf %379, %378 : vector<8x96xf32>
    %381 = arith.divf %379, %380 : vector<8x96xf32>
    %382 = vector.extract_strided_slice %381 {offsets = [0, 0], sizes = [8, 32], strides = [1, 1]} : vector<8x96xf32> to vector<8x32xf32>
    %383 = vector.extract_strided_slice %381 {offsets = [0, 32], sizes = [8, 32], strides = [1, 1]} : vector<8x96xf32> to vector<8x32xf32>
    %384 = vector.extract_strided_slice %381 {offsets = [0, 64], sizes = [8, 32], strides = [1, 1]} : vector<8x96xf32> to vector<8x32xf32>
    %385 = vector.extract_strided_slice %375 {offsets = [0, 96], sizes = [8, 32], strides = [1, 1]} : vector<8x128xf32> to vector<8x32xf32>
    %386 = math.tanh %385 : vector<8x32xf32>
    %387 = arith.mulf %383, %366 : vector<8x32xf32>
    %388 = arith.mulf %382, %386 : vector<8x32xf32>
    %389 = arith.addf %387, %388 : vector<8x32xf32>
    %390 = math.tanh %389 : vector<8x32xf32>
    %391 = arith.mulf %384, %390 : vector<8x32xf32>
    %c7_i32_142 = arith.constant 7 : i32
    %c1_143 = arith.constant 1 : index
    %c0_144 = arith.constant 0 : index
    %c0_145 = arith.constant 0 : index
    %392 = vector.load %arg3[%c1_143, %c0_144, %c0_145] : memref<2x32x128xf32, #tpu.memory_space<vmem>>, vector<1x32x128xf32>
    %393 = vector.shape_cast %392 : vector<1x32x128xf32> to vector<32x128xf32>
    %cst_146 = arith.constant dense<0.000000e+00> : vector<8x128xf32>
    %394 = tpu.matmul %391, %393, %cst_146 {dimension_numbers = #tpu.dot_dimension_numbers<[1], [0], [0], [1], [0, 0, 1, 1], [], []>} : vector<8x32xf32>, vector<32x128xf32>, vector<8x128xf32> -> vector<8x128xf32>
    %395 = arith.index_cast %c7_i32_142 : i32 to index
    %c0_147 = arith.constant 0 : index
    %c0_148 = arith.constant 0 : index
    %396 = vector.load %arg9[%395, %c0_147, %c0_148] : memref<8x8x128xf32, #tpu.memory_space<vmem>>, vector<1x8x128xf32>
    %397 = vector.shape_cast %396 : vector<1x8x128xf32> to vector<8x128xf32>
    %398 = arith.addf %394, %397 : vector<8x128xf32>
    %399 = vector.extract_strided_slice %398 {offsets = [0, 0], sizes = [8, 96], strides = [1, 1]} : vector<8x128xf32> to vector<8x96xf32>
    %400 = arith.negf %399 : vector<8x96xf32>
    %401 = math.exp %400 : vector<8x96xf32>
    %cst_149 = arith.constant 1.000000e+00 : f32
    %402 = vector.broadcast %cst_149 : f32 to vector<8x96xf32>
    %403 = arith.addf %402, %401 : vector<8x96xf32>
    %404 = arith.divf %402, %403 : vector<8x96xf32>
    %405 = vector.extract_strided_slice %404 {offsets = [0, 0], sizes = [8, 32], strides = [1, 1]} : vector<8x96xf32> to vector<8x32xf32>
    %406 = vector.extract_strided_slice %404 {offsets = [0, 32], sizes = [8, 32], strides = [1, 1]} : vector<8x96xf32> to vector<8x32xf32>
    %407 = vector.extract_strided_slice %404 {offsets = [0, 64], sizes = [8, 32], strides = [1, 1]} : vector<8x96xf32> to vector<8x32xf32>
    %408 = vector.extract_strided_slice %398 {offsets = [0, 96], sizes = [8, 32], strides = [1, 1]} : vector<8x128xf32> to vector<8x32xf32>
    %409 = math.tanh %408 : vector<8x32xf32>
    %410 = arith.mulf %406, %389 : vector<8x32xf32>
    %411 = arith.mulf %405, %409 : vector<8x32xf32>
    %412 = arith.addf %410, %411 : vector<8x32xf32>
    %413 = math.tanh %412 : vector<8x32xf32>
    %414 = arith.mulf %407, %413 : vector<8x32xf32>
    %c8_i32_150 = arith.constant 8 : i32
    %c0_151 = arith.constant 0 : index
    %c0_152 = arith.constant 0 : index
    %415 = vector.load %arg5[%c0_151, %c0_152] : memref<32x128xf32, #tpu.memory_space<vmem>>, vector<32x128xf32>
    %cst_153 = arith.constant dense<0.000000e+00> : vector<8x128xf32>
    %416 = tpu.matmul %414, %415, %cst_153 {dimension_numbers = #tpu.dot_dimension_numbers<[1], [0], [0], [1], [0, 0, 1, 1], [], []>} : vector<8x32xf32>, vector<32x128xf32>, vector<8x128xf32> -> vector<8x128xf32>
    %c0_154 = arith.constant 0 : index
    %c0_155 = arith.constant 0 : index
    %417 = vector.load %arg6[%c0_154, %c0_155] : memref<1x128xf32, #tpu.memory_space<vmem>>, vector<1x128xf32>
    %418 = vector.broadcast %417 : vector<1x128xf32> to vector<8x128xf32>
    %419 = arith.addf %416, %418 : vector<8x128xf32>
    %c0_156 = arith.constant 0 : index
    %c0_157 = arith.constant 0 : index
    %420 = vector.load %arg7[%c0_156, %c0_157] : memref<8x128xf32, #tpu.memory_space<vmem>>, vector<8x128xf32>
    tpu.vector_store %arg7[%c0_156, %c0_157], %419 {strides = array<i32>} : memref<8x128xf32, #tpu.memory_space<vmem>>, vector<8x128xf32>,
    return
  }
  func.func @transform_0(%arg0: i32) -> (i32, i32, i32) {
    %c0_i32 = arith.constant 0 : i32
    %c0_i32_0 = arith.constant 0 : i32
    %c0_i32_1 = arith.constant 0 : i32
    return %c0_i32, %arg0, %c0_i32_0 : i32, i32, i32
  }
  func.func @transform_1(%arg0: i32) -> (i32, i32, i32) {
    %c0_i32 = arith.constant 0 : i32
    %c0_i32_0 = arith.constant 0 : i32
    %c0_i32_1 = arith.constant 0 : i32
    %c0_i32_2 = arith.constant 0 : i32
    return %c0_i32, %c0_i32_0, %c0_i32_1 : i32, i32, i32
  }
  func.func @transform_2(%arg0: i32) -> (i32, i32, i32) {
    %c0_i32 = arith.constant 0 : i32
    %c0_i32_0 = arith.constant 0 : i32
    %c0_i32_1 = arith.constant 0 : i32
    %c0_i32_2 = arith.constant 0 : i32
    return %c0_i32, %c0_i32_0, %c0_i32_1 : i32, i32, i32
  }
  func.func @transform_3(%arg0: i32) -> (i32, i32, i32) {
    %c0_i32 = arith.constant 0 : i32
    %c0_i32_0 = arith.constant 0 : i32
    %c0_i32_1 = arith.constant 0 : i32
    %c0_i32_2 = arith.constant 0 : i32
    return %c0_i32, %c0_i32_0, %c0_i32_1 : i32, i32, i32
  }
  func.func @transform_4(%arg0: i32) -> (i32, i32) {
    %c0_i32 = arith.constant 0 : i32
    %c0_i32_0 = arith.constant 0 : i32
    %c0_i32_1 = arith.constant 0 : i32
    return %c0_i32, %c0_i32_0 : i32, i32
  }
  func.func @transform_5(%arg0: i32) -> (i32, i32) {
    %c0_i32 = arith.constant 0 : i32
    %c0_i32_0 = arith.constant 0 : i32
    %c0_i32_1 = arith.constant 0 : i32
    return %c0_i32, %c0_i32_0 : i32, i32
  }
  func.func @transform_6(%arg0: i32) -> (i32, i32) {
    %c0_i32 = arith.constant 0 : i32
    %c0_i32_0 = arith.constant 0 : i32
    return %arg0, %c0_i32 : i32, i32
  }
}

</mosaic_0001>

<llo_original>
// kernel: tpu_custom_call.1
$region0: #{tpu_custom_call.1}
  #allocation0 [shape = 'u32[]', space=smem, size = 0x4, offset = 0x4, fixed_abs, tag = 'smem constant byte address 0x4 - core index']
  #allocation1 [shape = 'u32[144,128]{1,0:T(1,128)}', space=vmem, size = 0x12000, scoped, tag = 'internal scratch']
  #allocation2 [shape = 'f32[8,8,32]{2,1,0:T(8,128)}', space=vmem, size = 0x8000, scoped, tag = 'scratch operand']
  #allocation3 [shape = 'f32[8,8,128]{2,1,0:T(8,128)}', space=vmem, size = 0x8000, scoped, tag = 'scratch operand']
  %s0 = inlined_call_operand.hbm [shape: f32[8,8,128], index: 0, kind: input, shape index: {}]
  %s1 = inlined_call_operand.hbm [shape: f32[2,32,128], index: 1, kind: input, shape index: {}]
  %s2 = inlined_call_operand.hbm [shape: f32[2,32,128], index: 2, kind: input, shape index: {}]
  %s3 = inlined_call_operand.vmem [shape: f32[2,1,128], index: 3, kind: input, shape index: {}]
  %s4 = inlined_call_operand.hbm [shape: f32[32,128], index: 4, kind: input, shape index: {}]
  %s5 = inlined_call_operand.vmem [shape: f32[1,128], index: 5, kind: input, shape index: {}]
  %s6 = inlined_call_operand.hbm [shape: f32[8,128], index: 6, kind: output, shape index: {}]
  %s7 = sld [smem:[#allocation0]]
  $region50: #{tpu_custom_call.1} parent=0
    _
  %s9 = ssub.s32 1, %s7
  %s10 = scalar_select 0, %s9, %s7
  $region1: #{tpu_custom_call.1} parent=0
    #allocation4 [shape = 'u8[32768]{0}', space=vmem, size = 0x8000, scoped, tag = 'input window, operand 0, single buffered']
    #allocation5 [shape = 's32[1]{0}', space=sflag, size = 0x4, scoped, tag = 'scoped memory for tpu_custom_call.1']
    #allocation6 [shape = 's32[1]{0}', space=sflag, size = 0x4, scoped, tag = 'scoped memory for tpu_custom_call.1']
    #allocation7 [shape = 'u8[32768]{0}', space=vmem, size = 0x8000, scoped, tag = 'input window, operand 1, single buffered']
    #allocation8 [shape = 's32[1]{0}', space=sflag, size = 0x4, scoped, tag = 'scoped memory for tpu_custom_call.1']
    #allocation9 [shape = 'u8[32768]{0}', space=vmem, size = 0x8000, scoped, tag = 'input window, operand 2, single buffered']
    #allocation10 [shape = 'u8[16384]{0}', space=vmem, size = 0x4000, scoped, tag = 'input window, operand 4, single buffered']
    #allocation11 [shape = 's32[1]{0}', space=sflag, size = 0x4, scoped, tag = 'scoped memory for tpu_custom_call.1']
    #allocation12 [shape = 'u8[4096]{0}', space=vmem, size = 0x1000, scoped, tag = 'output window, operand 0, single buffered']
    %11 = vsyncpa [#allocation5], 0
    %12 = vsyncpa [#allocation8], 0
    %13 = vsyncpa [#allocation11], 0
    %14 = vsyncpa [#allocation6], 0
    // Predicated region
    $region2: #{tpu_custom_call.1} parent=1 // pred_check
      _
    $region3: #{tpu_custom_call.1} parent=1 // pred_check_branch
      %16 = sbr.rel (0) target = $region5
    $region4: #{tpu_custom_call.1} parent=1 // pred_region
      %s18 = ssub.s32 1024, 1024
      %19 = vsyncadd [#allocation5], %s18
      %s20 = sshll.u32 [#allocation4], 4
      %s21 = int_to_ptr.vmem [resolvable:$true] %s20
      %26 = dma.hbm_to_vmem [thread:$0]  %s0, 1024, %s21, [#allocation5], 128, 128, 8
    $region5: #{tpu_custom_call.1} parent=1 // pred_fallthru
      _
    // Predicated region
    $region6: #{tpu_custom_call.1} parent=1 // pred_check
      _
    $region7: #{tpu_custom_call.1} parent=1 // pred_check_branch
      %28 = sbr.rel (0) target = $region9
    $region8: #{tpu_custom_call.1} parent=1 // pred_region
      %s30 = ssub.s32 1024, 1024
      %31 = vsyncadd [#allocation8], %s30
      %s32 = sshll.u32 [#allocation7], 4
      %s33 = int_to_ptr.vmem [resolvable:$true] %s32
      %38 = dma.hbm_to_vmem [thread:$0]  %s1, 1024, %s33, [#allocation8], 128, 128, 8
    $region9: #{tpu_custom_call.1} parent=1 // pred_fallthru
      _
    // Predicated region
    $region10: #{tpu_custom_call.1} parent=1 // pred_check
      _
    $region11: #{tpu_custom_call.1} parent=1 // pred_check_branch
      %40 = sbr.rel (0) target = $region13
    $region12: #{tpu_custom_call.1} parent=1 // pred_region
      %s42 = ssub.s32 1024, 1024
      %43 = vsyncadd [#allocation8], %s42
      %s44 = sshll.u32 [#allocation9], 4
      %s45 = int_to_ptr.vmem [resolvable:$true] %s44
      %50 = dma.hbm_to_vmem [thread:$0]  %s2, 1024, %s45, [#allocation8], 128, 128, 8
    $region13: #{tpu_custom_call.1} parent=1 // pred_fallthru
      _
    // Predicated region
    $region14: #{tpu_custom_call.1} parent=1 // pred_check
      _
    $region15: #{tpu_custom_call.1} parent=1 // pred_check_branch
      %52 = sbr.rel (0) target = $region17
    $region16: #{tpu_custom_call.1} parent=1 // pred_region
      _
    $region17: #{tpu_custom_call.1} parent=1 // pred_fallthru
      _
    // Predicated region
    $region18: #{tpu_custom_call.1} parent=1 // pred_check
      _
    $region19: #{tpu_custom_call.1} parent=1 // pred_check_branch
      %54 = sbr.rel (0) target = $region21
    $region20: #{tpu_custom_call.1} parent=1 // pred_region
      %s56 = ssub.s32 512, 512
      %57 = vsyncadd [#allocation11], %s56
      %s58 = sshll.u32 [#allocation10], 4
      %s59 = int_to_ptr.vmem [resolvable:$true] %s58
      %64 = dma.hbm_to_vmem [thread:$0]  %s4, 512, %s59, [#allocation11], 128, 128, 8
    $region21: #{tpu_custom_call.1} parent=1 // pred_fallthru
      _
    // Predicated region
    $region22: #{tpu_custom_call.1} parent=1 // pred_check
      _
    $region23: #{tpu_custom_call.1} parent=1 // pred_check_branch
      %66 = sbr.rel (0) target = $region25
    $region24: #{tpu_custom_call.1} parent=1 // pred_region
      _
    $region25: #{tpu_custom_call.1} parent=1 // pred_fallthru
      _
    // Predicated region
    $region26: #{tpu_custom_call.1} parent=1 // pred_check
      _
    $region27: #{tpu_custom_call.1} parent=1 // pred_check_branch
      %68 = sbr.rel (0) target = $region29
    $region28: #{tpu_custom_call.1} parent=1 // pred_region
      %69 = dma.done [#allocation5], 1024
    $region29: #{tpu_custom_call.1} parent=1 // pred_fallthru
      _
    // Predicated region
    $region30: #{tpu_custom_call.1} parent=1 // pred_check
      _
    $region31: #{tpu_custom_call.1} parent=1 // pred_check_branch
      %71 = sbr.rel (0) target = $region33
    $region32: #{tpu_custom_call.1} parent=1 // pred_region
      %72 = dma.done [#allocation8], 1024
    $region33: #{tpu_custom_call.1} parent=1 // pred_fallthru
      _
    // Predicated region
    $region34: #{tpu_custom_call.1} parent=1 // pred_check
      _
    $region35: #{tpu_custom_call.1} parent=1 // pred_check_branch
      %74 = sbr.rel (0) target = $region37
    $region36: #{tpu_custom_call.1} parent=1 // pred_region
      %75 = dma.done [#allocation8], 1024
    $region37: #{tpu_custom_call.1} parent=1 // pred_fallthru
      _
    // Predicated region
    $region38: #{tpu_custom_call.1} parent=1 // pred_check
      _
    $region39: #{tpu_custom_call.1} parent=1 // pred_check_branch
      %77 = sbr.rel (0) target = $region41
    $region40: #{tpu_custom_call.1} parent=1 // pred_region
      %78 = dma.done [#allocation11], 512
    $region41: #{tpu_custom_call.1} parent=1 // pred_fallthru
      _
    %v79 = vld [vmem:[#allocation9] sm:$0xff]
    %v80 = vld [vmem:[#allocation9 + $0x8] sm:$0xff]
    %v81 = vld [vmem:[#allocation9 + $0x10] sm:$0xff]
    %v82 = vld [vmem:[#allocation9 + $0x18] sm:$0xff]
    %v83 = vld [vmem:[#allocation4] sm:$0xff]
    %vm84 = vcmask 261120
    %v86 = vsel %vm84, 0.0, 0
    %88 = vmatprep.subr.mxu0 0.0
    %89 = vmatpush1.msra.mxu0 %v79
    %90 = vmatprep.subr.mxu0 0.0
    %91 = vmatpush1.msra.mxu0 %v80
    %92 = vmatprep.subr.mxu0 0.0
    %93 = vmatpush1.msra.mxu0 %v81
    %94 = vmatprep.subr.mxu0 0.0
    %95 = vmatpush1.msra.mxu0 %v82
    %96 = vmatprep.subr.mxu0 0.0
    %97 = vmatpush1.msra.mxu0 0.0
    %98 = vmatprep.subr.mxu0 0.0
    %99 = vmatpush1.msra.mxu0 0.0
    %100 = vmatprep.subr.mxu0 0.0
    %101 = vmatpush1.msra.mxu0 0.0
    %102 = vmatprep.subr.mxu0 0.0
    %103 = vmatpush1.msra.mxu0 0.0
    %104 = vmatprep.subr.mxu0 0.0
    %105 = vmatpush1.msra.mxu0 0.0
    %106 = vmatprep.subr.mxu0 0.0
    %107 = vmatpush1.msra.mxu0 0.0
    %108 = vmatprep.subr.mxu0 0.0
    %109 = vmatpush1.msra.mxu0 0.0
    %110 = vmatprep.subr.mxu0 0.0
    %111 = vmatpush1.msra.mxu0 0.0
    %112 = vmatprep.subr.mxu0 0.0
    %113 = vmatpush1.msra.mxu0 0.0
    %114 = vmatprep.subr.mxu0 0.0
    %115 = vmatpush1.msra.mxu0 0.0
    %116 = vmatprep.subr.mxu0 0.0
    %117 = vmatpush1.msra.mxu0 0.0
    %118 = vmatprep.subr.mxu0 0.0
    %119 = vmatpush1.msra.mxu0 0.0
    %120 = vmatprep.subr.mxu0 0.0
    %121 = vmatpush1.msra.mxu0 0.0
    %122 = vmatprep.subr.mxu0 0.0
    %123 = vmatpush1.msra.mxu0 0.0
    %124 = vmatprep.subr.mxu0 0.0
    %125 = vmatpush1.msra.mxu0 0.0
    %126 = vmatprep.subr.mxu0 0.0
    %127 = vmatpush1.msra.mxu0 0.0
    %128 = vmatprep.subr.mxu0 0.0
    %129 = vmatpush1.msra.mxu0 0.0
    %130 = vmatprep.subr.mxu0 0.0
    %131 = vmatpush1.msra.mxu0 0.0
    %132 = vmatprep.subr.mxu0 0.0
    %133 = vmatpush1.msra.mxu0 0.0
    %134 = vmatprep.subr.mxu0 0.0
    %135 = vmatpush1.msra.mxu0 0.0
    %136 = vmatprep.subr.mxu0 0.0
    %137 = vmatpush1.msra.mxu0 0.0
    %138 = vmatprep.subr.mxu0 0.0
    %139 = vmatpush1.msra.mxu0 0.0
    %140 = vmatprep.subr.mxu0 0.0
    %141 = vmatpush1.msra.mxu0 0.0
    %142 = vmatprep.subr.mxu0 0.0
    %143 = vmatpush1.msra.mxu0 0.0
    %144 = vmatprep.subr.mxu0 0.0
    %145 = vmatpush1.msra.mxu0 0.0
    %146 = vmatprep.subr.mxu0 0.0
    %147 = vmatpush1.msra.mxu0 0.0
    %148 = vmatprep.subr.mxu0 0.0
    %149 = vmatpush1.msra.mxu0 0.0
    %150 = vmatprep.subr.mxu0 0.0
    %151 = vmatpush1.msra.mxu0 0.0
    %152 = vmatprep.mubr.f32.mxu0 0.0
    %153 = vmatmul.mubr.f32.gmra.mrb[0].mxu0 %v86
    %v154 = vpop.f32.mrb[0].mxu0
    %v155 = vadd.f32 %v83, %v154
    %v156 = vpop.f32.mrb[0].mxu0
    %157 = vdwg.mxu0
    %v158 = vxor.u32 %v155, 2147483648
    %v159 = vmul.f32 %v158, 1.442695
    %v160 = vpow.pop %v159
    %v161 = vadd.f32 %v160, 1.0
    %v162 = vrcp.pop %v161
    %v163 = vmul.f32 1.0, %v162
    %v164 = vtanh.pop %v155
    %v165 = vmul.f32 %v163, 0.0
    %167 = vrot.lane.b32.xlu0 %v164, 32
    %v168 = vpop.permute.xlu0 %167
    %v170 = vmul.f32 %v163, %v168
    %172 = vrot.lane.b32.xlu0 %v170, 32
    %v173 = vpop.permute.xlu0 %172
    %v175 = vadd.f32 %v165, %v173
    %v176 = vtanh.pop %v175
    %178 = vrot.lane.b32.xlu0 %v176, 32
    %v179 = vpop.permute.xlu0 %178
    %v181 = vmul.f32 %v163, %v179
    %183 = vrot.lane.b32.xlu0 %v181, 64
    %v184 = vpop.permute.xlu0 %183
    %186 = vst.msk [vmem:[#allocation2] sm:$0xff] %vm84, %v184
    %v187 = vld [vmem:[#allocation9] sm:$0xff]
    %v188 = vld [vmem:[#allocation9 + $0x8] sm:$0xff]
    %v189 = vld [vmem:[#allocation9 + $0x10] sm:$0xff]
    %v190 = vld [vmem:[#allocation9 + $0x18] sm:$0xff]
    %s191 = scalar_lea.vmem [#allocation4], 8
    %v192 = vld [vmem:[%s191] sm:$0xff]
    %v193 = vsel %vm84, %v184, 0
    %195 = vmatprep.subr.mxu0 0.0
    %196 = vmatpush1.msra.mxu0 %v187
    %197 = vmatprep.subr.mxu0 0.0
    %198 = vmatpush1.msra.mxu0 %v188
    %199 = vmatprep.subr.mxu0 0.0
    %200 = vmatpush1.msra.mxu0 %v189
    %201 = vmatprep.subr.mxu0 0.0
    %202 = vmatpush1.msra.mxu0 %v190
    %203 = vmatprep.subr.mxu0 0.0
    %204 = vmatpush1.msra.mxu0 0.0
    %205 = vmatprep.subr.mxu0 0.0
    %206 = vmatpush1.msra.mxu0 0.0
    %207 = vmatprep.subr.mxu0 0.0
    %208 = vmatpush1.msra.mxu0 0.0
    %209 = vmatprep.subr.mxu0 0.0
    %210 = vmatpush1.msra.mxu0 0.0
    %211 = vmatprep.subr.mxu0 0.0
    %212 = vmatpush1.msra.mxu0 0.0
    %213 = vmatprep.subr.mxu0 0.0
    %214 = vmatpush1.msra.mxu0 0.0
    %215 = vmatprep.subr.mxu0 0.0
    %216 = vmatpush1.msra.mxu0 0.0
    %217 = vmatprep.subr.mxu0 0.0
    %218 = vmatpush1.msra.mxu0 0.0
    %219 = vmatprep.subr.mxu0 0.0
    %220 = vmatpush1.msra.mxu0 0.0
    %221 = vmatprep.subr.mxu0 0.0
    %222 = vmatpush1.msra.mxu0 0.0
    %223 = vmatprep.subr.mxu0 0.0
    %224 = vmatpush1.msra.mxu0 0.0
    %225 = vmatprep.subr.mxu0 0.0
    %226 = vmatpush1.msra.mxu0 0.0
    %227 = vmatprep.subr.mxu0 0.0
    %228 = vmatpush1.msra.mxu0 0.0
    %229 = vmatprep.subr.mxu0 0.0
    %230 = vmatpush1.msra.mxu0 0.0
    %231 = vmatprep.subr.mxu0 0.0
    %232 = vmatpush1.msra.mxu0 0.0
    %233 = vmatprep.subr.mxu0 0.0
    %234 = vmatpush1.msra.mxu0 0.0
    %235 = vmatprep.subr.mxu0 0.0
    %236 = vmatpush1.msra.mxu0 0.0
    %237 = vmatprep.subr.mxu0 0.0
    %238 = vmatpush1.msra.mxu0 0.0
    %239 = vmatprep.subr.mxu0 0.0
    %240 = vmatpush1.msra.mxu0 0.0
    %241 = vmatprep.subr.mxu0 0.0
    %242 = vmatpush1.msra.mxu0 0.0
    %243 = vmatprep.subr.mxu0 0.0
    %244 = vmatpush1.msra.mxu0 0.0
    %245 = vmatprep.subr.mxu0 0.0
    %246 = vmatpush1.msra.mxu0 0.0
    %247 = vmatprep.subr.mxu0 0.0
    %248 = vmatpush1.msra.mxu0 0.0
    %249 = vmatprep.subr.mxu0 0.0
    %250 = vmatpush1.msra.mxu0 0.0
    %251 = vmatprep.subr.mxu0 0.0
    %252 = vmatpush1.msra.mxu0 0.0
    %253 = vmatprep.subr.mxu0 0.0
    %254 = vmatpush1.msra.mxu0 0.0
    %255 = vmatprep.subr.mxu0 0.0
    %256 = vmatpush1.msra.mxu0 0.0
    %257 = vmatprep.subr.mxu0 0.0
    %258 = vmatpush1.msra.mxu0 0.0
    %259 = vmatprep.mubr.f32.mxu0 0.0
    %260 = vmatmul.mubr.f32.gmra.mrb[0].mxu0 %v193
    %v261 = vpop.f32.mrb[0].mxu0
    %v262 = vadd.f32 %v192, %v261
    %v263 = vpop.f32.mrb[0].mxu0
    %264 = vdwg.mxu0
    %v265 = vxor.u32 %v262, 2147483648
    %v266 = vmul.f32 %v265, 1.442695
    %v267 = vpow.pop %v266
    %v268 = vadd.f32 %v267, 1.0
    %v269 = vrcp.pop %v268
    %v270 = vmul.f32 1.0, %v269
    %v271 = vtanh.pop %v262
    %v272 = vmul.f32 %v270, %v175
    %274 = vrot.lane.b32.xlu0 %v271, 32
    %v275 = vpop.permute.xlu0 %274
    %v277 = vmul.f32 %v270, %v275
    %279 = vrot.lane.b32.xlu0 %v277, 32
    %v280 = vpop.permute.xlu0 %279
    %v282 = vadd.f32 %v272, %v280
    %v283 = vtanh.pop %v282
    %285 = vrot.lane.b32.xlu0 %v283, 32
    %v286 = vpop.permute.xlu0 %285
    %v288 = vmul.f32 %v270, %v286
    %290 = vrot.lane.b32.xlu0 %v288, 64
    %v291 = vpop.permute.xlu0 %290
    %s293 = scalar_lea.vmem [#allocation2], 8
    %294 = vst.msk [vmem:[%s293] sm:$0xff] %vm84, %v291
    %v295 = vld [vmem:[#allocation9] sm:$0xff]
    %v296 = vld [vmem:[#allocation9 + $0x8] sm:$0xff]
    %v297 = vld [vmem:[#allocation9 + $0x10] sm:$0xff]
    %v298 = vld [vmem:[#allocation9 + $0x18] sm:$0xff]
    %s299 = scalar_lea.vmem [#allocation4], 16
    %v300 = vld [vmem:[%s299] sm:$0xff]
    %v301 = vsel %vm84, %v291, 0
    %303 = vmatprep.subr.mxu0 0.0
    %304 = vmatpush1.msra.mxu0 %v295
    %305 = vmatprep.subr.mxu0 0.0
    %306 = vmatpush1.msra.mxu0 %v296
    %307 = vmatprep.subr.mxu0 0.0
    %308 = vmatpush1.msra.mxu0 %v297
    %309 = vmatprep.subr.mxu0 0.0
    %310 = vmatpush1.msra.mxu0 %v298
    %311 = vmatprep.subr.mxu0 0.0
    %312 = vmatpush1.msra.mxu0 0.0
    %313 = vmatprep.subr.mxu0 0.0
    %314 = vmatpush1.msra.mxu0 0.0
    %315 = vmatprep.subr.mxu0 0.0
    %316 = vmatpush1.msra.mxu0 0.0
    %317 = vmatprep.subr.mxu0 0.0
    %318 = vmatpush1.msra.mxu0 0.0
    %319 = vmatprep.subr.mxu0 0.0
    %320 = vmatpush1.msra.mxu0 0.0
    %321 = vmatprep.subr.mxu0 0.0
    %322 = vmatpush1.msra.mxu0 0.0
    %323 = vmatprep.subr.mxu0 0.0
    %324 = vmatpush1.msra.mxu0 0.0
    %325 = vmatprep.subr.mxu0 0.0
    %326 = vmatpush1.msra.mxu0 0.0
    %327 = vmatprep.subr.mxu0 0.0
    %328 = vmatpush1.msra.mxu0 0.0
    %329 = vmatprep.subr.mxu0 0.0
    %330 = vmatpush1.msra.mxu0 0.0
    %331 = vmatprep.subr.mxu0 0.0
    %332 = vmatpush1.msra.mxu0 0.0
    %333 = vmatprep.subr.mxu0 0.0
    %334 = vmatpush1.msra.mxu0 0.0
    %335 = vmatprep.subr.mxu0 0.0
    %336 = vmatpush1.msra.mxu0 0.0
    %337 = vmatprep.subr.mxu0 0.0
    %338 = vmatpush1.msra.mxu0 0.0
    %339 = vmatprep.subr.mxu0 0.0
    %340 = vmatpush1.msra.mxu0 0.0
    %341 = vmatprep.subr.mxu0 0.0
    %342 = vmatpush1.msra.mxu0 0.0
    %343 = vmatprep.subr.mxu0 0.0
    %344 = vmatpush1.msra.mxu0 0.0
    %345 = vmatprep.subr.mxu0 0.0
    %346 = vmatpush1.msra.mxu0 0.0
    %347 = vmatprep.subr.mxu0 0.0
    %348 = vmatpush1.msra.mxu0 0.0
    %349 = vmatprep.subr.mxu0 0.0
    %350 = vmatpush1.msra.mxu0 0.0
    %351 = vmatprep.subr.mxu0 0.0
    %352 = vmatpush1.msra.mxu0 0.0
    %353 = vmatprep.subr.mxu0 0.0
    %354 = vmatpush1.msra.mxu0 0.0
    %355 = vmatprep.subr.mxu0 0.0
    %356 = vmatpush1.msra.mxu0 0.0
    %357 = vmatprep.subr.mxu0 0.0
    %358 = vmatpush1.msra.mxu0 0.0
    %359 = vmatprep.subr.mxu0 0.0
    %360 = vmatpush1.msra.mxu0 0.0
    %361 = vmatprep.subr.mxu0 0.0
    %362 = vmatpush1.msra.mxu0 0.0
    %363 = vmatprep.subr.mxu0 0.0
    %364 = vmatpush1.msra.mxu0 0.0
    %365 = vmatprep.subr.mxu0 0.0
    %366 = vmatpush1.msra.mxu0 0.0
    %367 = vmatprep.mubr.f32.mxu0 0.0
    %368 = vmatmul.mubr.f32.gmra.mrb[0].mxu0 %v301
    %v369 = vpop.f32.mrb[0].mxu0
    %v370 = vadd.f32 %v300, %v369
    %v371 = vpop.f32.mrb[0].mxu0
    %372 = vdwg.mxu0
    %v373 = vxor.u32 %v370, 2147483648
    %v374 = vmul.f32 %v373, 1.442695
    %v375 = vpow.pop %v374
    %v376 = vadd.f32 %v375, 1.0
    %v377 = vrcp.pop %v376
    %v378 = vmul.f32 1.0, %v377
    %v379 = vtanh.pop %v370
    %v380 = vmul.f32 %v378, %v282
    %382 = vrot.lane.b32.xlu0 %v379, 32
    %v383 = vpop.permute.xlu0 %382
    %v385 = vmul.f32 %v378, %v383
    %387 = vrot.lane.b32.xlu0 %v385, 32
    %v388 = vpop.permute.xlu0 %387
    %v390 = vadd.f32 %v380, %v388
    %v391 = vtanh.pop %v390
    %393 = vrot.lane.b32.xlu0 %v391, 32
    %v394 = vpop.permute.xlu0 %393
    %v396 = vmul.f32 %v378, %v394
    %398 = vrot.lane.b32.xlu0 %v396, 64
    %v399 = vpop.permute.xlu0 %398
    %s401 = scalar_lea.vmem [#allocation2], 16
    %402 = vst.msk [vmem:[%s401] sm:$0xff] %vm84, %v399
    %v403 = vld [vmem:[#allocation9] sm:$0xff]
    %v404 = vld [vmem:[#allocation9 + $0x8] sm:$0xff]
    %v405 = vld [vmem:[#allocation9 + $0x10] sm:$0xff]
    %v406 = vld [vmem:[#allocation9 + $0x18] sm:$0xff]
    %s407 = scalar_lea.vmem [#allocation4], 24
    %v408 = vld [vmem:[%s407] sm:$0xff]
    %v409 = vsel %vm84, %v399, 0
    %411 = vmatprep.subr.mxu0 0.0
    %412 = vmatpush1.msra.mxu0 %v403
    %413 = vmatprep.subr.mxu0 0.0
    %414 = vmatpush1.msra.mxu0 %v404
    %415 = vmatprep.subr.mxu0 0.0
    %416 = vmatpush1.msra.mxu0 %v405
    %417 = vmatprep.subr.mxu0 0.0
    %418 = vmatpush1.msra.mxu0 %v406
    %419 = vmatprep.subr.mxu0 0.0
    %420 = vmatpush1.msra.mxu0 0.0
    %421 = vmatprep.subr.mxu0 0.0
    %422 = vmatpush1.msra.mxu0 0.0
    %423 = vmatprep.subr.mxu0 0.0
    %424 = vmatpush1.msra.mxu0 0.0
    %425 = vmatprep.subr.mxu0 0.0
    %426 = vmatpush1.msra.mxu0 0.0
    %427 = vmatprep.subr.mxu0 0.0
    %428 = vmatpush1.msra.mxu0 0.0
    %429 = vmatprep.subr.mxu0 0.0
    %430 = vmatpush1.msra.mxu0 0.0
    %431 = vmatprep.subr.mxu0 0.0
    %432 = vmatpush1.msra.mxu0 0.0
    %433 = vmatprep.subr.mxu0 0.0
    %434 = vmatpush1.msra.mxu0 0.0
    %435 = vmatprep.subr.mxu0 0.0
    %436 = vmatpush1.msra.mxu0 0.0
    %437 = vmatprep.subr.mxu0 0.0
    %438 = vmatpush1.msra.mxu0 0.0
    %439 = vmatprep.subr.mxu0 0.0
    %440 = vmatpush1.msra.mxu0 0.0
    %441 = vmatprep.subr.mxu0 0.0
    %442 = vmatpush1.msra.mxu0 0.0
    %443 = vmatprep.subr.mxu0 0.0
    %444 = vmatpush1.msra.mxu0 0.0
    %445 = vmatprep.subr.mxu0 0.0
    %446 = vmatpush1.msra.mxu0 0.0
    %447 = vmatprep.subr.mxu0 0.0
    %448 = vmatpush1.msra.mxu0 0.0
    %449 = vmatprep.subr.mxu0 0.0
    %450 = vmatpush1.msra.mxu0 0.0
    %451 = vmatprep.subr.mxu0 0.0
    %452 = vmatpush1.msra.mxu0 0.0
    %453 = vmatprep.subr.mxu0 0.0
    %454 = vmatpush1.msra.mxu0 0.0
    %455 = vmatprep.subr.mxu0 0.0
    %456 = vmatpush1.msra.mxu0 0.0
    %457 = vmatprep.subr.mxu0 0.0
    %458 = vmatpush1.msra.mxu0 0.0
    %459 = vmatprep.subr.mxu0 0.0
    %460 = vmatpush1.msra.mxu0 0.0
    %461 = vmatprep.subr.mxu0 0.0
    %462 = vmatpush1.msra.mxu0 0.0
    %463 = vmatprep.subr.mxu0 0.0
    %464 = vmatpush1.msra.mxu0 0.0
    %465 = vmatprep.subr.mxu0 0.0
    %466 = vmatpush1.msra.mxu0 0.0
    %467 = vmatprep.subr.mxu0 0.0
    %468 = vmatpush1.msra.mxu0 0.0
    %469 = vmatprep.subr.mxu0 0.0
    %470 = vmatpush1.msra.mxu0 0.0
    %471 = vmatprep.subr.mxu0 0.0
    %472 = vmatpush1.msra.mxu0 0.0
    %473 = vmatprep.subr.mxu0 0.0
    %474 = vmatpush1.msra.mxu0 0.0
    %475 = vmatprep.mubr.f32.mxu0 0.0
    %476 = vmatmul.mubr.f32.gmra.mrb[0].mxu0 %v409
    %v477 = vpop.f32.mrb[0].mxu0
    %v478 = vadd.f32 %v408, %v477
    %v479 = vpop.f32.mrb[0].mxu0
    %480 = vdwg.mxu0
    %v481 = vxor.u32 %v478, 2147483648
    %v482 = vmul.f32 %v481, 1.442695
    %v483 = vpow.pop %v482
    %v484 = vadd.f32 %v483, 1.0
    %v485 = vrcp.pop %v484
    %v486 = vmul.f32 1.0, %v485
    %v487 = vtanh.pop %v478
    %v488 = vmul.f32 %v486, %v390
    %490 = vrot.lane.b32.xlu0 %v487, 32
    %v491 = vpop.permute.xlu0 %490
    %v493 = vmul.f32 %v486, %v491
    %495 = vrot.lane.b32.xlu0 %v493, 32
    %v496 = vpop.permute.xlu0 %495
    %v498 = vadd.f32 %v488, %v496
    %v499 = vtanh.pop %v498
    %501 = vrot.lane.b32.xlu0 %v499, 32
    %v502 = vpop.permute.xlu0 %501
    %v504 = vmul.f32 %v486, %v502
    %506 = vrot.lane.b32.xlu0 %v504, 64
    %v507 = vpop.permute.xlu0 %506
    %s509 = scalar_lea.vmem [#allocation2], 24
    %510 = vst.msk [vmem:[%s509] sm:$0xff] %vm84, %v507
    %v511 = vld [vmem:[#allocation9] sm:$0xff]
    %v512 = vld [vmem:[#allocation9 + $0x8] sm:$0xff]
    %v513 = vld [vmem:[#allocation9 + $0x10] sm:$0xff]
    %v514 = vld [vmem:[#allocation9 + $0x18] sm:$0xff]
    %s515 = scalar_lea.vmem [#allocation4], 32
    %v516 = vld [vmem:[%s515] sm:$0xff]
    %v517 = vsel %vm84, %v507, 0
    %519 = vmatprep.subr.mxu0 0.0
    %520 = vmatpush1.msra.mxu0 %v511
    %521 = vmatprep.subr.mxu0 0.0
    %522 = vmatpush1.msra.mxu0 %v512
    %523 = vmatprep.subr.mxu0 0.0
    %524 = vmatpush1.msra.mxu0 %v513
    %525 = vmatprep.subr.mxu0 0.0
    %526 = vmatpush1.msra.mxu0 %v514
    %527 = vmatprep.subr.mxu0 0.0
    %528 = vmatpush1.msra.mxu0 0.0
    %529 = vmatprep.subr.mxu0 0.0
    %530 = vmatpush1.msra.mxu0 0.0
    %531 = vmatprep.subr.mxu0 0.0
    %532 = vmatpush1.msra.mxu0 0.0
    %533 = vmatprep.subr.mxu0 0.0
    %534 = vmatpush1.msra.mxu0 0.0
    %535 = vmatprep.subr.mxu0 0.0
    %536 = vmatpush1.msra.mxu0 0.0
    %537 = vmatprep.subr.mxu0 0.0
    %538 = vmatpush1.msra.mxu0 0.0
    %539 = vmatprep.subr.mxu0 0.0
    %540 = vmatpush1.msra.mxu0 0.0
    %541 = vmatprep.subr.mxu0 0.0
    %542 = vmatpush1.msra.mxu0 0.0
    %543 = vmatprep.subr.mxu0 0.0
    %544 = vmatpush1.msra.mxu0 0.0
    %545 = vmatprep.subr.mxu0 0.0
    %546 = vmatpush1.msra.mxu0 0.0
    %547 = vmatprep.subr.mxu0 0.0
    %548 = vmatpush1.msra.mxu0 0.0
    %549 = vmatprep.subr.mxu0 0.0
    %550 = vmatpush1.msra.mxu0 0.0
    %551 = vmatprep.subr.mxu0 0.0
    %552 = vmatpush1.msra.mxu0 0.0
    %553 = vmatprep.subr.mxu0 0.0
    %554 = vmatpush1.msra.mxu0 0.0
    %555 = vmatprep.subr.mxu0 0.0
    %556 = vmatpush1.msra.mxu0 0.0
    %557 = vmatprep.subr.mxu0 0.0
    %558 = vmatpush1.msra.mxu0 0.0
    %559 = vmatprep.subr.mxu0 0.0
    %560 = vmatpush1.msra.mxu0 0.0
    %561 = vmatprep.subr.mxu0 0.0
    %562 = vmatpush1.msra.mxu0 0.0
    %563 = vmatprep.subr.mxu0 0.0
    %564 = vmatpush1.msra.mxu0 0.0
    %565 = vmatprep.subr.mxu0 0.0
    %566 = vmatpush1.msra.mxu0 0.0
    %567 = vmatprep.subr.mxu0 0.0
    %568 = vmatpush1.msra.mxu0 0.0
    %569 = vmatprep.subr.mxu0 0.0
    %570 = vmatpush1.msra.mxu0 0.0
    %571 = vmatprep.subr.mxu0 0.0
    %572 = vmatpush1.msra.mxu0 0.0
    %573 = vmatprep.subr.mxu0 0.0
    %574 = vmatpush1.msra.mxu0 0.0
    %575 = vmatprep.subr.mxu0 0.0
    %576 = vmatpush1.msra.mxu0 0.0
    %577 = vmatprep.subr.mxu0 0.0
    %578 = vmatpush1.msra.mxu0 0.0
    %579 = vmatprep.subr.mxu0 0.0
    %580 = vmatpush1.msra.mxu0 0.0
    %581 = vmatprep.subr.mxu0 0.0
    %582 = vmatpush1.msra.mxu0 0.0
    %583 = vmatprep.mubr.f32.mxu0 0.0
    %584 = vmatmul.mubr.f32.gmra.mrb[0].mxu0 %v517
    %v585 = vpop.f32.mrb[0].mxu0
    %v586 = vadd.f32 %v516, %v585
    %v587 = vpop.f32.mrb[0].mxu0
    %588 = vdwg.mxu0
    %v589 = vxor.u32 %v586, 2147483648
    %v590 = vmul.f32 %v589, 1.442695
    %v591 = vpow.pop %v590
    %v592 = vadd.f32 %v591, 1.0
    %v593 = vrcp.pop %v592
    %v594 = vmul.f32 1.0, %v593
    %v595 = vtanh.pop %v586
    %v596 = vmul.f32 %v594, %v498
    %598 = vrot.lane.b32.xlu0 %v595, 32
    %v599 = vpop.permute.xlu0 %598
    %v601 = vmul.f32 %v594, %v599
    %603 = vrot.lane.b32.xlu0 %v601, 32
    %v604 = vpop.permute.xlu0 %603
    %v606 = vadd.f32 %v596, %v604
    %v607 = vtanh.pop %v606
    %609 = vrot.lane.b32.xlu0 %v607, 32
    %v610 = vpop.permute.xlu0 %609
    %v612 = vmul.f32 %v594, %v610
    %614 = vrot.lane.b32.xlu0 %v612, 64
    %v615 = vpop.permute.xlu0 %614
    %s617 = scalar_lea.vmem [#allocation2], 32
    %618 = vst.msk [vmem:[%s617] sm:$0xff] %vm84, %v615
    %v619 = vld [vmem:[#allocation9] sm:$0xff]
    %v620 = vld [vmem:[#allocation9 + $0x8] sm:$0xff]
    %v621 = vld [vmem:[#allocation9 + $0x10] sm:$0xff]
    %v622 = vld [vmem:[#allocation9 + $0x18] sm:$0xff]
    %s623 = scalar_lea.vmem [#allocation4], 40
    %v624 = vld [vmem:[%s623] sm:$0xff]
    %v625 = vsel %vm84, %v615, 0
    %627 = vmatprep.subr.mxu0 0.0
    %628 = vmatpush1.msra.mxu0 %v619
    %629 = vmatprep.subr.mxu0 0.0
    %630 = vmatpush1.msra.mxu0 %v620
    %631 = vmatprep.subr.mxu0 0.0
    %632 = vmatpush1.msra.mxu0 %v621
    %633 = vmatprep.subr.mxu0 0.0
    %634 = vmatpush1.msra.mxu0 %v622
    %635 = vmatprep.subr.mxu0 0.0
    %636 = vmatpush1.msra.mxu0 0.0
    %637 = vmatprep.subr.mxu0 0.0
    %638 = vmatpush1.msra.mxu0 0.0
    %639 = vmatprep.subr.mxu0 0.0
    %640 = vmatpush1.msra.mxu0 0.0
    %641 = vmatprep.subr.mxu0 0.0
    %642 = vmatpush1.msra.mxu0 0.0
    %643 = vmatprep.subr.mxu0 0.0
    %644 = vmatpush1.msra.mxu0 0.0
    %645 = vmatprep.subr.mxu0 0.0
    %646 = vmatpush1.msra.mxu0 0.0
    %647 = vmatprep.subr.mxu0 0.0
    %648 = vmatpush1.msra.mxu0 0.0
    %649 = vmatprep.subr.mxu0 0.0
    %650 = vmatpush1.msra.mxu0 0.0
    %651 = vmatprep.subr.mxu0 0.0
    %652 = vmatpush1.msra.mxu0 0.0
    %653 = vmatprep.subr.mxu0 0.0
    %654 = vmatpush1.msra.mxu0 0.0
    %655 = vmatprep.subr.mxu0 0.0
    %656 = vmatpush1.msra.mxu0 0.0
    %657 = vmatprep.subr.mxu0 0.0
    %658 = vmatpush1.msra.mxu0 0.0
    %659 = vmatprep.subr.mxu0 0.0
    %660 = vmatpush1.msra.mxu0 0.0
    %661 = vmatprep.subr.mxu0 0.0
    %662 = vmatpush1.msra.mxu0 0.0
    %663 = vmatprep.subr.mxu0 0.0
    %664 = vmatpush1.msra.mxu0 0.0
    %665 = vmatprep.subr.mxu0 0.0
    %666 = vmatpush1.msra.mxu0 0.0
    %667 = vmatprep.subr.mxu0 0.0
    %668 = vmatpush1.msra.mxu0 0.0
    %669 = vmatprep.subr.mxu0 0.0
    %670 = vmatpush1.msra.mxu0 0.0
    %671 = vmatprep.subr.mxu0 0.0
    %672 = vmatpush1.msra.mxu0 0.0
    %673 = vmatprep.subr.mxu0 0.0
    %674 = vmatpush1.msra.mxu0 0.0
    %675 = vmatprep.subr.mxu0 0.0
    %676 = vmatpush1.msra.mxu0 0.0
    %677 = vmatprep.subr.mxu0 0.0
    %678 = vmatpush1.msra.mxu0 0.0
    %679 = vmatprep.subr.mxu0 0.0
    %680 = vmatpush1.msra.mxu0 0.0
    %681 = vmatprep.subr.mxu0 0.0
    %682 = vmatpush1.msra.mxu0 0.0
    %683 = vmatprep.subr.mxu0 0.0
    %684 = vmatpush1.msra.mxu0 0.0
    %685 = vmatprep.subr.mxu0 0.0
    %686 = vmatpush1.msra.mxu0 0.0
    %687 = vmatprep.subr.mxu0 0.0
    %688 = vmatpush1.msra.mxu0 0.0
    %689 = vmatprep.subr.mxu0 0.0
    %690 = vmatpush1.msra.mxu0 0.0
    %691 = vmatprep.mubr.f32.mxu0 0.0
    %692 = vmatmul.mubr.f32.gmra.mrb[0].mxu0 %v625
    %v693 = vpop.f32.mrb[0].mxu0
    %v694 = vadd.f32 %v624, %v693
    %v695 = vpop.f32.mrb[0].mxu0
    %696 = vdwg.mxu0
    %v697 = vxor.u32 %v694, 2147483648
    %v698 = vmul.f32 %v697, 1.442695
    %v699 = vpow.pop %v698
    %v700 = vadd.f32 %v699, 1.0
    %v701 = vrcp.pop %v700
    %v702 = vmul.f32 1.0, %v701
    %v703 = vtanh.pop %v694
    %v704 = vmul.f32 %v702, %v606
    %706 = vrot.lane.b32.xlu0 %v703, 32
    %v707 = vpop.permute.xlu0 %706
    %v709 = vmul.f32 %v702, %v707
    %711 = vrot.lane.b32.xlu0 %v709, 32
    %v712 = vpop.permute.xlu0 %711
    %v714 = vadd.f32 %v704, %v712
    %v715 = vtanh.pop %v714
    %717 = vrot.lane.b32.xlu0 %v715, 32
    %v718 = vpop.permute.xlu0 %717
    %v720 = vmul.f32 %v702, %v718
    %722 = vrot.lane.b32.xlu0 %v720, 64
    %v723 = vpop.permute.xlu0 %722
    %s725 = scalar_lea.vmem [#allocation2], 40
    %726 = vst.msk [vmem:[%s725] sm:$0xff] %vm84, %v723
    %v727 = vld [vmem:[#allocation9] sm:$0xff]
    %v728 = vld [vmem:[#allocation9 + $0x8] sm:$0xff]
    %v729 = vld [vmem:[#allocation9 + $0x10] sm:$0xff]
    %v730 = vld [vmem:[#allocation9 + $0x18] sm:$0xff]
    %s731 = scalar_lea.vmem [#allocation4], 48
    %v732 = vld [vmem:[%s731] sm:$0xff]
    %v733 = vsel %vm84, %v723, 0
    %735 = vmatprep.subr.mxu0 0.0
    %736 = vmatpush1.msra.mxu0 %v727
    %737 = vmatprep.subr.mxu0 0.0
    %738 = vmatpush1.msra.mxu0 %v728
    %739 = vmatprep.subr.mxu0 0.0
    %740 = vmatpush1.msra.mxu0 %v729
    %741 = vmatprep.subr.mxu0 0.0
    %742 = vmatpush1.msra.mxu0 %v730
    %743 = vmatprep.subr.mxu0 0.0
    %744 = vmatpush1.msra.mxu0 0.0
    %745 = vmatprep.subr.mxu0 0.0
    %746 = vmatpush1.msra.mxu0 0.0
    %747 = vmatprep.subr.mxu0 0.0
    %748 = vmatpush1.msra.mxu0 0.0
    %749 = vmatprep.subr.mxu0 0.0
    %750 = vmatpush1.msra.mxu0 0.0
    %751 = vmatprep.subr.mxu0 0.0
    %752 = vmatpush1.msra.mxu0 0.0
    %753 = vmatprep.subr.mxu0 0.0
    %754 = vmatpush1.msra.mxu0 0.0
    %755 = vmatprep.subr.mxu0 0.0
    %756 = vmatpush1.msra.mxu0 0.0
    %757 = vmatprep.subr.mxu0 0.0
    %758 = vmatpush1.msra.mxu0 0.0
    %759 = vmatprep.subr.mxu0 0.0
    %760 = vmatpush1.msra.mxu0 0.0
    %761 = vmatprep.subr.mxu0 0.0
    %762 = vmatpush1.msra.mxu0 0.0
    %763 = vmatprep.subr.mxu0 0.0
    %764 = vmatpush1.msra.mxu0 0.0
    %765 = vmatprep.subr.mxu0 0.0
    %766 = vmatpush1.msra.mxu0 0.0
    %767 = vmatprep.subr.mxu0 0.0
    %768 = vmatpush1.msra.mxu0 0.0
    %769 = vmatprep.subr.mxu0 0.0
    %770 = vmatpush1.msra.mxu0 0.0
    %771 = vmatprep.subr.mxu0 0.0
    %772 = vmatpush1.msra.mxu0 0.0
    %773 = vmatprep.subr.mxu0 0.0
    %774 = vmatpush1.msra.mxu0 0.0
    %775 = vmatprep.subr.mxu0 0.0
    %776 = vmatpush1.msra.mxu0 0.0
    %777 = vmatprep.subr.mxu0 0.0
    %778 = vmatpush1.msra.mxu0 0.0
    %779 = vmatprep.subr.mxu0 0.0
    %780 = vmatpush1.msra.mxu0 0.0
    %781 = vmatprep.subr.mxu0 0.0
    %782 = vmatpush1.msra.mxu0 0.0
    %783 = vmatprep.subr.mxu0 0.0
    %784 = vmatpush1.msra.mxu0 0.0
    %785 = vmatprep.subr.mxu0 0.0
    %786 = vmatpush1.msra.mxu0 0.0
    %787 = vmatprep.subr.mxu0 0.0
    %788 = vmatpush1.msra.mxu0 0.0
    %789 = vmatprep.subr.mxu0 0.0
    %790 = vmatpush1.msra.mxu0 0.0
    %791 = vmatprep.subr.mxu0 0.0
    %792 = vmatpush1.msra.mxu0 0.0
    %793 = vmatprep.subr.mxu0 0.0
    %794 = vmatpush1.msra.mxu0 0.0
    %795 = vmatprep.subr.mxu0 0.0
    %796 = vmatpush1.msra.mxu0 0.0
    %797 = vmatprep.subr.mxu0 0.0
    %798 = vmatpush1.msra.mxu0 0.0
    %799 = vmatprep.mubr.f32.mxu0 0.0
    %800 = vmatmul.mubr.f32.gmra.mrb[0].mxu0 %v733
    %v801 = vpop.f32.mrb[0].mxu0
    %v802 = vadd.f32 %v732, %v801
    %v803 = vpop.f32.mrb[0].mxu0
    %804 = vdwg.mxu0
    %v805 = vxor.u32 %v802, 2147483648
    %v806 = vmul.f32 %v805, 1.442695
    %v807 = vpow.pop %v806
    %v808 = vadd.f32 %v807, 1.0
    %v809 = vrcp.pop %v808
    %v810 = vmul.f32 1.0, %v809
    %v811 = vtanh.pop %v802
    %v812 = vmul.f32 %v810, %v714
    %814 = vrot.lane.b32.xlu0 %v811, 32
    %v815 = vpop.permute.xlu0 %814
    %v817 = vmul.f32 %v810, %v815
    %819 = vrot.lane.b32.xlu0 %v817, 32
    %v820 = vpop.permute.xlu0 %819
    %v822 = vadd.f32 %v812, %v820
    %v823 = vtanh.pop %v822
    %825 = vrot.lane.b32.xlu0 %v823, 32
    %v826 = vpop.permute.xlu0 %825
    %v828 = vmul.f32 %v810, %v826
    %830 = vrot.lane.b32.xlu0 %v828, 64
    %v831 = vpop.permute.xlu0 %830
    %s833 = scalar_lea.vmem [#allocation2], 48
    %834 = vst.msk [vmem:[%s833] sm:$0xff] %vm84, %v831
    %v835 = vld [vmem:[#allocation9] sm:$0xff]
    %v836 = vld [vmem:[#allocation9 + $0x8] sm:$0xff]
    %v837 = vld [vmem:[#allocation9 + $0x10] sm:$0xff]
    %v838 = vld [vmem:[#allocation9 + $0x18] sm:$0xff]
    %s839 = scalar_lea.vmem [#allocation4], 56
    %v840 = vld [vmem:[%s839] sm:$0xff]
    %v841 = vsel %vm84, %v831, 0
    %843 = vmatprep.subr.mxu0 0.0
    %844 = vmatpush1.msra.mxu0 %v835
    %845 = vmatprep.subr.mxu0 0.0
    %846 = vmatpush1.msra.mxu0 %v836
    %847 = vmatprep.subr.mxu0 0.0
    %848 = vmatpush1.msra.mxu0 %v837
    %849 = vmatprep.subr.mxu0 0.0
    %850 = vmatpush1.msra.mxu0 %v838
    %851 = vmatprep.subr.mxu0 0.0
    %852 = vmatpush1.msra.mxu0 0.0
    %853 = vmatprep.subr.mxu0 0.0
    %854 = vmatpush1.msra.mxu0 0.0
    %855 = vmatprep.subr.mxu0 0.0
    %856 = vmatpush1.msra.mxu0 0.0
    %857 = vmatprep.subr.mxu0 0.0
    %858 = vmatpush1.msra.mxu0 0.0
    %859 = vmatprep.subr.mxu0 0.0
    %860 = vmatpush1.msra.mxu0 0.0
    %861 = vmatprep.subr.mxu0 0.0
    %862 = vmatpush1.msra.mxu0 0.0
    %863 = vmatprep.subr.mxu0 0.0
    %864 = vmatpush1.msra.mxu0 0.0
    %865 = vmatprep.subr.mxu0 0.0
    %866 = vmatpush1.msra.mxu0 0.0
    %867 = vmatprep.subr.mxu0 0.0
    %868 = vmatpush1.msra.mxu0 0.0
    %869 = vmatprep.subr.mxu0 0.0
    %870 = vmatpush1.msra.mxu0 0.0
    %871 = vmatprep.subr.mxu0 0.0
    %872 = vmatpush1.msra.mxu0 0.0
    %873 = vmatprep.subr.mxu0 0.0
    %874 = vmatpush1.msra.mxu0 0.0
    %875 = vmatprep.subr.mxu0 0.0
    %876 = vmatpush1.msra.mxu0 0.0
    %877 = vmatprep.subr.mxu0 0.0
    %878 = vmatpush1.msra.mxu0 0.0
    %879 = vmatprep.subr.mxu0 0.0
    %880 = vmatpush1.msra.mxu0 0.0
    %881 = vmatprep.subr.mxu0 0.0
    %882 = vmatpush1.msra.mxu0 0.0
    %883 = vmatprep.subr.mxu0 0.0
    %884 = vmatpush1.msra.mxu0 0.0
    %885 = vmatprep.subr.mxu0 0.0
    %886 = vmatpush1.msra.mxu0 0.0
    %887 = vmatprep.subr.mxu0 0.0
    %888 = vmatpush1.msra.mxu0 0.0
    %889 = vmatprep.subr.mxu0 0.0
    %890 = vmatpush1.msra.mxu0 0.0
    %891 = vmatprep.subr.mxu0 0.0
    %892 = vmatpush1.msra.mxu0 0.0
    %893 = vmatprep.subr.mxu0 0.0
    %894 = vmatpush1.msra.mxu0 0.0
    %895 = vmatprep.subr.mxu0 0.0
    %896 = vmatpush1.msra.mxu0 0.0
    %897 = vmatprep.subr.mxu0 0.0
    %898 = vmatpush1.msra.mxu0 0.0
    %899 = vmatprep.subr.mxu0 0.0
    %900 = vmatpush1.msra.mxu0 0.0
    %901 = vmatprep.subr.mxu0 0.0
    %902 = vmatpush1.msra.mxu0 0.0
    %903 = vmatprep.subr.mxu0 0.0
    %904 = vmatpush1.msra.mxu0 0.0
    %905 = vmatprep.subr.mxu0 0.0
    %906 = vmatpush1.msra.mxu0 0.0
    %907 = vmatprep.mubr.f32.mxu0 0.0
    %908 = vmatmul.mubr.f32.gmra.mrb[0].mxu0 %v841
    %v909 = vpop.f32.mrb[0].mxu0
    %v910 = vadd.f32 %v840, %v909
    %v911 = vpop.f32.mrb[0].mxu0
    %912 = vdwg.mxu0
    %v913 = vxor.u32 %v910, 2147483648
    %v914 = vmul.f32 %v913, 1.442695
    %v915 = vpow.pop %v914
    %v916 = vadd.f32 %v915, 1.0
    %v917 = vrcp.pop %v916
    %v918 = vmul.f32 1.0, %v917
    %v919 = vtanh.pop %v910
    %v920 = vmul.f32 %v918, %v822
    %922 = vrot.lane.b32.xlu0 %v919, 32
    %v923 = vpop.permute.xlu0 %922
    %v925 = vmul.f32 %v918, %v923
    %927 = vrot.lane.b32.xlu0 %v925, 32
    %v928 = vpop.permute.xlu0 %927
    %v930 = vadd.f32 %v920, %v928
    %v931 = vtanh.pop %v930
    %933 = vrot.lane.b32.xlu0 %v931, 32
    %v934 = vpop.permute.xlu0 %933
    %v936 = vmul.f32 %v918, %v934
    %938 = vrot.lane.b32.xlu0 %v936, 64
    %v939 = vpop.permute.xlu0 %938
    %s941 = scalar_lea.vmem [#allocation2], 56
    %942 = vst.msk [vmem:[%s941] sm:$0xff] %vm84, %v939
    %v943 = vld [vmem:[#allocation2] sm:$0xff]
    %v944 = vld [vmem:[#allocation2 + $0x8] sm:$0xff]
    %v945 = vld [vmem:[#allocation2 + $0x10] sm:$0xff]
    %v946 = vld [vmem:[#allocation2 + $0x18] sm:$0xff]
    %v947 = vld [vmem:[#allocation2 + $0x20] sm:$0xff]
    %v948 = vld [vmem:[#allocation2 + $0x28] sm:$0xff]
    %v949 = vld [vmem:[#allocation2 + $0x30] sm:$0xff]
    %v950 = vld [vmem:[#allocation2 + $0x38] sm:$0xff]
    %s951 = scalar_lea.vmem [#allocation7], 32
    %v952 = vld [vmem:[%s951] sm:$0xff]
    %v953 = vld [vmem:[%s951 + $0x8] sm:$0xff]
    %v954 = vld [vmem:[%s951 + $0x10] sm:$0xff]
    %v955 = vld [vmem:[%s951 + $0x18] sm:$0xff]
    %s956 = scalar_lea.vmem %s3, 1
    %v957 = vld [vmem:[%s956] sm:$0x1]
    %v959 = vlaneseq
    %v960 = vshrl.u32 %v959, 7
    %v961 = vsub.s32 0, %v960
    %v962 = vrot.slane %v957, %v961
    %v965 = vsel %vm84, %v943, 0
    %v968 = vsel %vm84, %v944, 0
    %v971 = vsel %vm84, %v945, 0
    %v974 = vsel %vm84, %v946, 0
    %v977 = vsel %vm84, %v947, 0
    %v980 = vsel %vm84, %v948, 0
    %v983 = vsel %vm84, %v949, 0
    %v986 = vsel %vm84, %v950, 0
    %988 = vmatprep.subr.mxu0 0.0
    %989 = vmatpush1.msra.mxu0 %v952
    %990 = vmatprep.subr.mxu0 0.0
    %991 = vmatpush1.msra.mxu0 %v953
    %992 = vmatprep.subr.mxu0 0.0
    %993 = vmatpush1.msra.mxu0 %v954
    %994 = vmatprep.subr.mxu0 0.0
    %995 = vmatpush1.msra.mxu0 %v955
    %996 = vmatprep.subr.mxu0 0.0
    %997 = vmatpush1.msra.mxu0 0.0
    %998 = vmatprep.subr.mxu0 0.0
    %999 = vmatpush1.msra.mxu0 0.0
    %1000 = vmatprep.subr.mxu0 0.0
    %1001 = vmatpush1.msra.mxu0 0.0
    %1002 = vmatprep.subr.mxu0 0.0
    %1003 = vmatpush1.msra.mxu0 0.0
    %1004 = vmatprep.subr.mxu0 0.0
    %1005 = vmatpush1.msra.mxu0 0.0
    %1006 = vmatprep.subr.mxu0 0.0
    %1007 = vmatpush1.msra.mxu0 0.0
    %1008 = vmatprep.subr.mxu0 0.0
    %1009 = vmatpush1.msra.mxu0 0.0
    %1010 = vmatprep.subr.mxu0 0.0
    %1011 = vmatpush1.msra.mxu0 0.0
    %1012 = vmatprep.subr.mxu0 0.0
    %1013 = vmatpush1.msra.mxu0 0.0
    %1014 = vmatprep.subr.mxu0 0.0
    %1015 = vmatpush1.msra.mxu0 0.0
    %1016 = vmatprep.subr.mxu0 0.0
    %1017 = vmatpush1.msra.mxu0 0.0
    %1018 = vmatprep.subr.mxu0 0.0
    %1019 = vmatpush1.msra.mxu0 0.0
    %1020 = vmatprep.subr.mxu0 0.0
    %1021 = vmatpush1.msra.mxu0 0.0
    %1022 = vmatprep.subr.mxu0 0.0
    %1023 = vmatpush1.msra.mxu0 0.0
    %1024 = vmatprep.subr.mxu0 0.0
    %1025 = vmatpush1.msra.mxu0 0.0
    %1026 = vmatprep.subr.mxu0 0.0
    %1027 = vmatpush1.msra.mxu0 0.0
    %1028 = vmatprep.subr.mxu0 0.0
    %1029 = vmatpush1.msra.mxu0 0.0
    %1030 = vmatprep.subr.mxu0 0.0
    %1031 = vmatpush1.msra.mxu0 0.0
    %1032 = vmatprep.subr.mxu0 0.0
    %1033 = vmatpush1.msra.mxu0 0.0
    %1034 = vmatprep.subr.mxu0 0.0
    %1035 = vmatpush1.msra.mxu0 0.0
    %1036 = vmatprep.subr.mxu0 0.0
    %1037 = vmatpush1.msra.mxu0 0.0
    %1038 = vmatprep.subr.mxu0 0.0
    %1039 = vmatpush1.msra.mxu0 0.0
    %1040 = vmatprep.subr.mxu0 0.0
    %1041 = vmatpush1.msra.mxu0 0.0
    %1042 = vmatprep.subr.mxu0 0.0
    %1043 = vmatpush1.msra.mxu0 0.0
    %1044 = vmatprep.subr.mxu0 0.0
    %1045 = vmatpush1.msra.mxu0 0.0
    %1046 = vmatprep.subr.mxu0 0.0
    %1047 = vmatpush1.msra.mxu0 0.0
    %1048 = vmatprep.subr.mxu0 0.0
    %1049 = vmatpush1.msra.mxu0 0.0
    %1050 = vmatprep.subr.mxu0 0.0
    %1051 = vmatpush1.msra.mxu0 0.0
    %1052 = vmatprep.mubr.f32.mxu0 0.0
    %1053 = vmatmul.mubr.f32.gmra.mrb[0].mxu0 %v965
    %v1054 = vpop.f32.mrb[0].mxu0
    %v1055 = vadd.f32 %v962, %v1054
    %v1056 = vpop.f32.mrb[0].mxu0
    %1057 = vmatprep.mubr.f32.mxu0 0.0
    %1058 = vmatmul.mubr.f32.gmra.mrb[0].mxu0 %v968
    %v1059 = vpop.f32.mrb[0].mxu0
    %v1060 = vadd.f32 %v962, %v1059
    %v1061 = vpop.f32.mrb[0].mxu0
    %1062 = vmatprep.mubr.f32.mxu0 0.0
    %1063 = vmatmul.mubr.f32.gmra.mrb[0].mxu0 %v971
    %v1064 = vpop.f32.mrb[0].mxu0
    %v1065 = vadd.f32 %v962, %v1064
    %v1066 = vpop.f32.mrb[0].mxu0
    %1067 = vmatprep.mubr.f32.mxu0 0.0
    %1068 = vmatmul.mubr.f32.gmra.mrb[0].mxu0 %v974
    %v1069 = vpop.f32.mrb[0].mxu0
    %v1070 = vadd.f32 %v962, %v1069
    %v1071 = vpop.f32.mrb[0].mxu0
    %1072 = vmatprep.mubr.f32.mxu0 0.0
    %1073 = vmatmul.mubr.f32.gmra.mrb[0].mxu0 %v977
    %v1074 = vpop.f32.mrb[0].mxu0
    %v1075 = vadd.f32 %v962, %v1074
    %v1076 = vpop.f32.mrb[0].mxu0
    %1077 = vmatprep.mubr.f32.mxu0 0.0
    %1078 = vmatmul.mubr.f32.gmra.mrb[0].mxu0 %v980
    %v1079 = vpop.f32.mrb[0].mxu0
    %v1080 = vadd.f32 %v962, %v1079
    %v1081 = vpop.f32.mrb[0].mxu0
    %1082 = vmatprep.mubr.f32.mxu0 0.0
    %1083 = vmatmul.mubr.f32.gmra.mrb[0].mxu0 %v983
    %v1084 = vpop.f32.mrb[0].mxu0
    %v1085 = vadd.f32 %v962, %v1084
    %v1086 = vpop.f32.mrb[0].mxu0
    %1087 = vmatprep.mubr.f32.mxu0 0.0
    %1088 = vmatmul.mubr.f32.gmra.mrb[0].mxu0 %v986
    %v1089 = vpop.f32.mrb[0].mxu0
    %v1090 = vadd.f32 %v962, %v1089
    %v1091 = vpop.f32.mrb[0].mxu0
    %1092 = vdwg.mxu0
    %1093 = vst [vmem:[#allocation3] sm:$0xff] %v1055
    %1094 = vst [vmem:[#allocation3 + $0x8] sm:$0xff] %v1060
    %1095 = vst [vmem:[#allocation3 + $0x10] sm:$0xff] %v1065
    %1096 = vst [vmem:[#allocation3 + $0x18] sm:$0xff] %v1070
    %1097 = vst [vmem:[#allocation3 + $0x20] sm:$0xff] %v1075
    %1098 = vst [vmem:[#allocation3 + $0x28] sm:$0xff] %v1080
    %1099 = vst [vmem:[#allocation3 + $0x30] sm:$0xff] %v1085
    %1100 = vst [vmem:[#allocation3 + $0x38] sm:$0xff] %v1090
    %s1101 = scalar_lea.vmem [#allocation9], 32
    %v1102 = vld [vmem:[%s1101] sm:$0xff]
    %v1103 = vld [vmem:[%s1101 + $0x8] sm:$0xff]
    %v1104 = vld [vmem:[%s1101 + $0x10] sm:$0xff]
    %v1105 = vld [vmem:[%s1101 + $0x18] sm:$0xff]
    %v1106 = vld [vmem:[#allocation3] sm:$0xff]
    %1107 = vmatprep.subr.mxu0 0.0
    %1108 = vmatpush1.msra.mxu0 %v1102
    %1109 = vmatprep.subr.mxu0 0.0
    %1110 = vmatpush1.msra.mxu0 %v1103
    %1111 = vmatprep.subr.mxu0 0.0
    %1112 = vmatpush1.msra.mxu0 %v1104
    %1113 = vmatprep.subr.mxu0 0.0
    %1114 = vmatpush1.msra.mxu0 %v1105
    %1115 = vmatprep.subr.mxu0 0.0
    %1116 = vmatpush1.msra.mxu0 0.0
    %1117 = vmatprep.subr.mxu0 0.0
    %1118 = vmatpush1.msra.mxu0 0.0
    %1119 = vmatprep.subr.mxu0 0.0
    %1120 = vmatpush1.msra.mxu0 0.0
    %1121 = vmatprep.subr.mxu0 0.0
    %1122 = vmatpush1.msra.mxu0 0.0
    %1123 = vmatprep.subr.mxu0 0.0
    %1124 = vmatpush1.msra.mxu0 0.0
    %1125 = vmatprep.subr.mxu0 0.0
    %1126 = vmatpush1.msra.mxu0 0.0
    %1127 = vmatprep.subr.mxu0 0.0
    %1128 = vmatpush1.msra.mxu0 0.0
    %1129 = vmatprep.subr.mxu0 0.0
    %1130 = vmatpush1.msra.mxu0 0.0
    %1131 = vmatprep.subr.mxu0 0.0
    %1132 = vmatpush1.msra.mxu0 0.0
    %1133 = vmatprep.subr.mxu0 0.0
    %1134 = vmatpush1.msra.mxu0 0.0
    %1135 = vmatprep.subr.mxu0 0.0
    %1136 = vmatpush1.msra.mxu0 0.0
    %1137 = vmatprep.subr.mxu0 0.0
    %1138 = vmatpush1.msra.mxu0 0.0
    %1139 = vmatprep.subr.mxu0 0.0
    %1140 = vmatpush1.msra.mxu0 0.0
    %1141 = vmatprep.subr.mxu0 0.0
    %1142 = vmatpush1.msra.mxu0 0.0
    %1143 = vmatprep.subr.mxu0 0.0
    %1144 = vmatpush1.msra.mxu0 0.0
    %1145 = vmatprep.subr.mxu0 0.0
    %1146 = vmatpush1.msra.mxu0 0.0
    %1147 = vmatprep.subr.mxu0 0.0
    %1148 = vmatpush1.msra.mxu0 0.0
    %1149 = vmatprep.subr.mxu0 0.0
    %1150 = vmatpush1.msra.mxu0 0.0
    %1151 = vmatprep.subr.mxu0 0.0
    %1152 = vmatpush1.msra.mxu0 0.0
    %1153 = vmatprep.subr.mxu0 0.0
    %1154 = vmatpush1.msra.mxu0 0.0
    %1155 = vmatprep.subr.mxu0 0.0
    %1156 = vmatpush1.msra.mxu0 0.0
    %1157 = vmatprep.subr.mxu0 0.0
    %1158 = vmatpush1.msra.mxu0 0.0
    %1159 = vmatprep.subr.mxu0 0.0
    %1160 = vmatpush1.msra.mxu0 0.0
    %1161 = vmatprep.subr.mxu0 0.0
    %1162 = vmatpush1.msra.mxu0 0.0
    %1163 = vmatprep.subr.mxu0 0.0
    %1164 = vmatpush1.msra.mxu0 0.0
    %1165 = vmatprep.subr.mxu0 0.0
    %1166 = vmatpush1.msra.mxu0 0.0
    %1167 = vmatprep.subr.mxu0 0.0
    %1168 = vmatpush1.msra.mxu0 0.0
    %1169 = vmatprep.subr.mxu0 0.0
    %1170 = vmatpush1.msra.mxu0 0.0
    %1171 = vmatprep.mubr.f32.mxu0 0.0
    %1172 = vmatmul.mubr.f32.gmra.mrb[0].mxu0 %v86
    %v1173 = vpop.f32.mrb[0].mxu0
    %v1174 = vadd.f32 %v1106, %v1173
    %v1175 = vpop.f32.mrb[0].mxu0
    %1176 = vdwg.mxu0
    %v1177 = vxor.u32 %v1174, 2147483648
    %v1178 = vmul.f32 %v1177, 1.442695
    %v1179 = vpow.pop %v1178
    %v1180 = vadd.f32 %v1179, 1.0
    %v1181 = vrcp.pop %v1180
    %v1182 = vmul.f32 1.0, %v1181
    %v1183 = vtanh.pop %v1174
    %v1184 = vmul.f32 %v1182, 0.0
    %1186 = vrot.lane.b32.xlu0 %v1183, 32
    %v1187 = vpop.permute.xlu0 %1186
    %v1189 = vmul.f32 %v1182, %v1187
    %1191 = vrot.lane.b32.xlu0 %v1189, 32
    %v1192 = vpop.permute.xlu0 %1191
    %v1194 = vadd.f32 %v1184, %v1192
    %v1195 = vtanh.pop %v1194
    %1197 = vrot.lane.b32.xlu0 %v1195, 32
    %v1198 = vpop.permute.xlu0 %1197
    %v1200 = vmul.f32 %v1182, %v1198
    %s1201 = scalar_lea.vmem [#allocation3], 8
    %v1202 = vld [vmem:[%s1201] sm:$0xff]
    %1204 = vrot.lane.b32.xlu0 %v1200, 64
    %v1205 = vpop.permute.xlu0 %1204
    %v1206 = vsel %vm84, %v1205, 0
    %1208 = vmatprep.subr.mxu0 0.0
    %1209 = vmatpush1.msra.mxu0 %v1102
    %1210 = vmatprep.subr.mxu0 0.0
    %1211 = vmatpush1.msra.mxu0 %v1103
    %1212 = vmatprep.subr.mxu0 0.0
    %1213 = vmatpush1.msra.mxu0 %v1104
    %1214 = vmatprep.subr.mxu0 0.0
    %1215 = vmatpush1.msra.mxu0 %v1105
    %1216 = vmatprep.subr.mxu0 0.0
    %1217 = vmatpush1.msra.mxu0 0.0
    %1218 = vmatprep.subr.mxu0 0.0
    %1219 = vmatpush1.msra.mxu0 0.0
    %1220 = vmatprep.subr.mxu0 0.0
    %1221 = vmatpush1.msra.mxu0 0.0
    %1222 = vmatprep.subr.mxu0 0.0
    %1223 = vmatpush1.msra.mxu0 0.0
    %1224 = vmatprep.subr.mxu0 0.0
    %1225 = vmatpush1.msra.mxu0 0.0
    %1226 = vmatprep.subr.mxu0 0.0
    %1227 = vmatpush1.msra.mxu0 0.0
    %1228 = vmatprep.subr.mxu0 0.0
    %1229 = vmatpush1.msra.mxu0 0.0
    %1230 = vmatprep.subr.mxu0 0.0
    %1231 = vmatpush1.msra.mxu0 0.0
    %1232 = vmatprep.subr.mxu0 0.0
    %1233 = vmatpush1.msra.mxu0 0.0
    %1234 = vmatprep.subr.mxu0 0.0
    %1235 = vmatpush1.msra.mxu0 0.0
    %1236 = vmatprep.subr.mxu0 0.0
    %1237 = vmatpush1.msra.mxu0 0.0
    %1238 = vmatprep.subr.mxu0 0.0
    %1239 = vmatpush1.msra.mxu0 0.0
    %1240 = vmatprep.subr.mxu0 0.0
    %1241 = vmatpush1.msra.mxu0 0.0
    %1242 = vmatprep.subr.mxu0 0.0
    %1243 = vmatpush1.msra.mxu0 0.0
    %1244 = vmatprep.subr.mxu0 0.0
    %1245 = vmatpush1.msra.mxu0 0.0
    %1246 = vmatprep.subr.mxu0 0.0
    %1247 = vmatpush1.msra.mxu0 0.0
    %1248 = vmatprep.subr.mxu0 0.0
    %1249 = vmatpush1.msra.mxu0 0.0
    %1250 = vmatprep.subr.mxu0 0.0
    %1251 = vmatpush1.msra.mxu0 0.0
    %1252 = vmatprep.subr.mxu0 0.0
    %1253 = vmatpush1.msra.mxu0 0.0
    %1254 = vmatprep.subr.mxu0 0.0
    %1255 = vmatpush1.msra.mxu0 0.0
    %1256 = vmatprep.subr.mxu0 0.0
    %1257 = vmatpush1.msra.mxu0 0.0
    %1258 = vmatprep.subr.mxu0 0.0
    %1259 = vmatpush1.msra.mxu0 0.0
    %1260 = vmatprep.subr.mxu0 0.0
    %1261 = vmatpush1.msra.mxu0 0.0
    %1262 = vmatprep.subr.mxu0 0.0
    %1263 = vmatpush1.msra.mxu0 0.0
    %1264 = vmatprep.subr.mxu0 0.0
    %1265 = vmatpush1.msra.mxu0 0.0
    %1266 = vmatprep.subr.mxu0 0.0
    %1267 = vmatpush1.msra.mxu0 0.0
    %1268 = vmatprep.subr.mxu0 0.0
    %1269 = vmatpush1.msra.mxu0 0.0
    %1270 = vmatprep.subr.mxu0 0.0
    %1271 = vmatpush1.msra.mxu0 0.0
    %1272 = vmatprep.mubr.f32.mxu0 0.0
    %1273 = vmatmul.mubr.f32.gmra.mrb[0].mxu0 %v1206
    %v1274 = vpop.f32.mrb[0].mxu0
    %v1275 = vadd.f32 %v1202, %v1274
    %v1276 = vpop.f32.mrb[0].mxu0
    %1277 = vdwg.mxu0
    %v1278 = vxor.u32 %v1275, 2147483648
    %v1279 = vmul.f32 %v1278, 1.442695
    %v1280 = vpow.pop %v1279
    %v1281 = vadd.f32 %v1280, 1.0
    %v1282 = vrcp.pop %v1281
    %v1283 = vmul.f32 1.0, %v1282
    %v1284 = vtanh.pop %v1275
    %v1285 = vmul.f32 %v1283, %v1194
    %1287 = vrot.lane.b32.xlu0 %v1284, 32
    %v1288 = vpop.permute.xlu0 %1287
    %v1290 = vmul.f32 %v1283, %v1288
    %1292 = vrot.lane.b32.xlu0 %v1290, 32
    %v1293 = vpop.permute.xlu0 %1292
    %v1295 = vadd.f32 %v1285, %v1293
    %v1296 = vtanh.pop %v1295
    %1298 = vrot.lane.b32.xlu0 %v1296, 32
    %v1299 = vpop.permute.xlu0 %1298
    %v1301 = vmul.f32 %v1283, %v1299
    %s1302 = scalar_lea.vmem [#allocation3], 16
    %v1303 = vld [vmem:[%s1302] sm:$0xff]
    %1305 = vrot.lane.b32.xlu0 %v1301, 64
    %v1306 = vpop.permute.xlu0 %1305
    %v1307 = vsel %vm84, %v1306, 0
    %1309 = vmatprep.subr.mxu0 0.0
    %1310 = vmatpush1.msra.mxu0 %v1102
    %1311 = vmatprep.subr.mxu0 0.0
    %1312 = vmatpush1.msra.mxu0 %v1103
    %1313 = vmatprep.subr.mxu0 0.0
    %1314 = vmatpush1.msra.mxu0 %v1104
    %1315 = vmatprep.subr.mxu0 0.0
    %1316 = vmatpush1.msra.mxu0 %v1105
    %1317 = vmatprep.subr.mxu0 0.0
    %1318 = vmatpush1.msra.mxu0 0.0
    %1319 = vmatprep.subr.mxu0 0.0
    %1320 = vmatpush1.msra.mxu0 0.0
    %1321 = vmatprep.subr.mxu0 0.0
    %1322 = vmatpush1.msra.mxu0 0.0
    %1323 = vmatprep.subr.mxu0 0.0
    %1324 = vmatpush1.msra.mxu0 0.0
    %1325 = vmatprep.subr.mxu0 0.0
    %1326 = vmatpush1.msra.mxu0 0.0
    %1327 = vmatprep.subr.mxu0 0.0
    %1328 = vmatpush1.msra.mxu0 0.0
    %1329 = vmatprep.subr.mxu0 0.0
    %1330 = vmatpush1.msra.mxu0 0.0
    %1331 = vmatprep.subr.mxu0 0.0
    %1332 = vmatpush1.msra.mxu0 0.0
    %1333 = vmatprep.subr.mxu0 0.0
    %1334 = vmatpush1.msra.mxu0 0.0
    %1335 = vmatprep.subr.mxu0 0.0
    %1336 = vmatpush1.msra.mxu0 0.0
    %1337 = vmatprep.subr.mxu0 0.0
    %1338 = vmatpush1.msra.mxu0 0.0
    %1339 = vmatprep.subr.mxu0 0.0
    %1340 = vmatpush1.msra.mxu0 0.0
    %1341 = vmatprep.subr.mxu0 0.0
    %1342 = vmatpush1.msra.mxu0 0.0
    %1343 = vmatprep.subr.mxu0 0.0
    %1344 = vmatpush1.msra.mxu0 0.0
    %1345 = vmatprep.subr.mxu0 0.0
    %1346 = vmatpush1.msra.mxu0 0.0
    %1347 = vmatprep.subr.mxu0 0.0
    %1348 = vmatpush1.msra.mxu0 0.0
    %1349 = vmatprep.subr.mxu0 0.0
    %1350 = vmatpush1.msra.mxu0 0.0
    %1351 = vmatprep.subr.mxu0 0.0
    %1352 = vmatpush1.msra.mxu0 0.0
    %1353 = vmatprep.subr.mxu0 0.0
    %1354 = vmatpush1.msra.mxu0 0.0
    %1355 = vmatprep.subr.mxu0 0.0
    %1356 = vmatpush1.msra.mxu0 0.0
    %1357 = vmatprep.subr.mxu0 0.0
    %1358 = vmatpush1.msra.mxu0 0.0
    %1359 = vmatprep.subr.mxu0 0.0
    %1360 = vmatpush1.msra.mxu0 0.0
    %1361 = vmatprep.subr.mxu0 0.0
    %1362 = vmatpush1.msra.mxu0 0.0
    %1363 = vmatprep.subr.mxu0 0.0
    %1364 = vmatpush1.msra.mxu0 0.0
    %1365 = vmatprep.subr.mxu0 0.0
    %1366 = vmatpush1.msra.mxu0 0.0
    %1367 = vmatprep.subr.mxu0 0.0
    %1368 = vmatpush1.msra.mxu0 0.0
    %1369 = vmatprep.subr.mxu0 0.0
    %1370 = vmatpush1.msra.mxu0 0.0
    %1371 = vmatprep.subr.mxu0 0.0
    %1372 = vmatpush1.msra.mxu0 0.0
    %1373 = vmatprep.mubr.f32.mxu0 0.0
    %1374 = vmatmul.mubr.f32.gmra.mrb[0].mxu0 %v1307
    %v1375 = vpop.f32.mrb[0].mxu0
    %v1376 = vadd.f32 %v1303, %v1375
    %v1377 = vpop.f32.mrb[0].mxu0
    %1378 = vdwg.mxu0
    %v1379 = vxor.u32 %v1376, 2147483648
    %v1380 = vmul.f32 %v1379, 1.442695
    %v1381 = vpow.pop %v1380
    %v1382 = vadd.f32 %v1381, 1.0
    %v1383 = vrcp.pop %v1382
    %v1384 = vmul.f32 1.0, %v1383
    %v1385 = vtanh.pop %v1376
    %v1386 = vmul.f32 %v1384, %v1295
    %1388 = vrot.lane.b32.xlu0 %v1385, 32
    %v1389 = vpop.permute.xlu0 %1388
    %v1391 = vmul.f32 %v1384, %v1389
    %1393 = vrot.lane.b32.xlu0 %v1391, 32
    %v1394 = vpop.permute.xlu0 %1393
    %v1396 = vadd.f32 %v1386, %v1394
    %v1397 = vtanh.pop %v1396
    %1399 = vrot.lane.b32.xlu0 %v1397, 32
    %v1400 = vpop.permute.xlu0 %1399
    %v1402 = vmul.f32 %v1384, %v1400
    %s1403 = scalar_lea.vmem [#allocation3], 24
    %v1404 = vld [vmem:[%s1403] sm:$0xff]
    %1406 = vrot.lane.b32.xlu0 %v1402, 64
    %v1407 = vpop.permute.xlu0 %1406
    %v1408 = vsel %vm84, %v1407, 0
    %1410 = vmatprep.subr.mxu0 0.0
    %1411 = vmatpush1.msra.mxu0 %v1102
    %1412 = vmatprep.subr.mxu0 0.0
    %1413 = vmatpush1.msra.mxu0 %v1103
    %1414 = vmatprep.subr.mxu0 0.0
    %1415 = vmatpush1.msra.mxu0 %v1104
    %1416 = vmatprep.subr.mxu0 0.0
    %1417 = vmatpush1.msra.mxu0 %v1105
    %1418 = vmatprep.subr.mxu0 0.0
    %1419 = vmatpush1.msra.mxu0 0.0
    %1420 = vmatprep.subr.mxu0 0.0
    %1421 = vmatpush1.msra.mxu0 0.0
    %1422 = vmatprep.subr.mxu0 0.0
    %1423 = vmatpush1.msra.mxu0 0.0
    %1424 = vmatprep.subr.mxu0 0.0
    %1425 = vmatpush1.msra.mxu0 0.0
    %1426 = vmatprep.subr.mxu0 0.0
    %1427 = vmatpush1.msra.mxu0 0.0
    %1428 = vmatprep.subr.mxu0 0.0
    %1429 = vmatpush1.msra.mxu0 0.0
    %1430 = vmatprep.subr.mxu0 0.0
    %1431 = vmatpush1.msra.mxu0 0.0
    %1432 = vmatprep.subr.mxu0 0.0
    %1433 = vmatpush1.msra.mxu0 0.0
    %1434 = vmatprep.subr.mxu0 0.0
    %1435 = vmatpush1.msra.mxu0 0.0
    %1436 = vmatprep.subr.mxu0 0.0
    %1437 = vmatpush1.msra.mxu0 0.0
    %1438 = vmatprep.subr.mxu0 0.0
    %1439 = vmatpush1.msra.mxu0 0.0
    %1440 = vmatprep.subr.mxu0 0.0
    %1441 = vmatpush1.msra.mxu0 0.0
    %1442 = vmatprep.subr.mxu0 0.0
    %1443 = vmatpush1.msra.mxu0 0.0
    %1444 = vmatprep.subr.mxu0 0.0
    %1445 = vmatpush1.msra.mxu0 0.0
    %1446 = vmatprep.subr.mxu0 0.0
    %1447 = vmatpush1.msra.mxu0 0.0
    %1448 = vmatprep.subr.mxu0 0.0
    %1449 = vmatpush1.msra.mxu0 0.0
    %1450 = vmatprep.subr.mxu0 0.0
    %1451 = vmatpush1.msra.mxu0 0.0
    %1452 = vmatprep.subr.mxu0 0.0
    %1453 = vmatpush1.msra.mxu0 0.0
    %1454 = vmatprep.subr.mxu0 0.0
    %1455 = vmatpush1.msra.mxu0 0.0
    %1456 = vmatprep.subr.mxu0 0.0
    %1457 = vmatpush1.msra.mxu0 0.0
    %1458 = vmatprep.subr.mxu0 0.0
    %1459 = vmatpush1.msra.mxu0 0.0
    %1460 = vmatprep.subr.mxu0 0.0
    %1461 = vmatpush1.msra.mxu0 0.0
    %1462 = vmatprep.subr.mxu0 0.0
    %1463 = vmatpush1.msra.mxu0 0.0
    %1464 = vmatprep.subr.mxu0 0.0
    %1465 = vmatpush1.msra.mxu0 0.0
    %1466 = vmatprep.subr.mxu0 0.0
    %1467 = vmatpush1.msra.mxu0 0.0
    %1468 = vmatprep.subr.mxu0 0.0
    %1469 = vmatpush1.msra.mxu0 0.0
    %1470 = vmatprep.subr.mxu0 0.0
    %1471 = vmatpush1.msra.mxu0 0.0
    %1472 = vmatprep.subr.mxu0 0.0
    %1473 = vmatpush1.msra.mxu0 0.0
    %1474 = vmatprep.mubr.f32.mxu0 0.0
    %1475 = vmatmul.mubr.f32.gmra.mrb[0].mxu0 %v1408
    %v1476 = vpop.f32.mrb[0].mxu0
    %v1477 = vadd.f32 %v1404, %v1476
    %v1478 = vpop.f32.mrb[0].mxu0
    %1479 = vdwg.mxu0
    %v1480 = vxor.u32 %v1477, 2147483648
    %v1481 = vmul.f32 %v1480, 1.442695
    %v1482 = vpow.pop %v1481
    %v1483 = vadd.f32 %v1482, 1.0
    %v1484 = vrcp.pop %v1483
    %v1485 = vmul.f32 1.0, %v1484
    %v1486 = vtanh.pop %v1477
    %v1487 = vmul.f32 %v1485, %v1396
    %1489 = vrot.lane.b32.xlu0 %v1486, 32
    %v1490 = vpop.permute.xlu0 %1489
    %v1492 = vmul.f32 %v1485, %v1490
    %1494 = vrot.lane.b32.xlu0 %v1492, 32
    %v1495 = vpop.permute.xlu0 %1494
    %v1497 = vadd.f32 %v1487, %v1495
    %v1498 = vtanh.pop %v1497
    %1500 = vrot.lane.b32.xlu0 %v1498, 32
    %v1501 = vpop.permute.xlu0 %1500
    %v1503 = vmul.f32 %v1485, %v1501
    %s1504 = scalar_lea.vmem [#allocation3], 32
    %v1505 = vld [vmem:[%s1504] sm:$0xff]
    %1507 = vrot.lane.b32.xlu0 %v1503, 64
    %v1508 = vpop.permute.xlu0 %1507
    %v1509 = vsel %vm84, %v1508, 0
    %1511 = vmatprep.subr.mxu0 0.0
    %1512 = vmatpush1.msra.mxu0 %v1102
    %1513 = vmatprep.subr.mxu0 0.0
    %1514 = vmatpush1.msra.mxu0 %v1103
    %1515 = vmatprep.subr.mxu0 0.0
    %1516 = vmatpush1.msra.mxu0 %v1104
    %1517 = vmatprep.subr.mxu0 0.0
    %1518 = vmatpush1.msra.mxu0 %v1105
    %1519 = vmatprep.subr.mxu0 0.0
    %1520 = vmatpush1.msra.mxu0 0.0
    %1521 = vmatprep.subr.mxu0 0.0
    %1522 = vmatpush1.msra.mxu0 0.0
    %1523 = vmatprep.subr.mxu0 0.0
    %1524 = vmatpush1.msra.mxu0 0.0
    %1525 = vmatprep.subr.mxu0 0.0
    %1526 = vmatpush1.msra.mxu0 0.0
    %1527 = vmatprep.subr.mxu0 0.0
    %1528 = vmatpush1.msra.mxu0 0.0
    %1529 = vmatprep.subr.mxu0 0.0
    %1530 = vmatpush1.msra.mxu0 0.0
    %1531 = vmatprep.subr.mxu0 0.0
    %1532 = vmatpush1.msra.mxu0 0.0
    %1533 = vmatprep.subr.mxu0 0.0
    %1534 = vmatpush1.msra.mxu0 0.0
    %1535 = vmatprep.subr.mxu0 0.0
    %1536 = vmatpush1.msra.mxu0 0.0
    %1537 = vmatprep.subr.mxu0 0.0
    %1538 = vmatpush1.msra.mxu0 0.0
    %1539 = vmatprep.subr.mxu0 0.0
    %1540 = vmatpush1.msra.mxu0 0.0
    %1541 = vmatprep.subr.mxu0 0.0
    %1542 = vmatpush1.msra.mxu0 0.0
    %1543 = vmatprep.subr.mxu0 0.0
    %1544 = vmatpush1.msra.mxu0 0.0
    %1545 = vmatprep.subr.mxu0 0.0
    %1546 = vmatpush1.msra.mxu0 0.0
    %1547 = vmatprep.subr.mxu0 0.0
    %1548 = vmatpush1.msra.mxu0 0.0
    %1549 = vmatprep.subr.mxu0 0.0
    %1550 = vmatpush1.msra.mxu0 0.0
    %1551 = vmatprep.subr.mxu0 0.0
    %1552 = vmatpush1.msra.mxu0 0.0
    %1553 = vmatprep.subr.mxu0 0.0
    %1554 = vmatpush1.msra.mxu0 0.0
    %1555 = vmatprep.subr.mxu0 0.0
    %1556 = vmatpush1.msra.mxu0 0.0
    %1557 = vmatprep.subr.mxu0 0.0
    %1558 = vmatpush1.msra.mxu0 0.0
    %1559 = vmatprep.subr.mxu0 0.0
    %1560 = vmatpush1.msra.mxu0 0.0
    %1561 = vmatprep.subr.mxu0 0.0
    %1562 = vmatpush1.msra.mxu0 0.0
    %1563 = vmatprep.subr.mxu0 0.0
    %1564 = vmatpush1.msra.mxu0 0.0
    %1565 = vmatprep.subr.mxu0 0.0
    %1566 = vmatpush1.msra.mxu0 0.0
    %1567 = vmatprep.subr.mxu0 0.0
    %1568 = vmatpush1.msra.mxu0 0.0
    %1569 = vmatprep.subr.mxu0 0.0
    %1570 = vmatpush1.msra.mxu0 0.0
    %1571 = vmatprep.subr.mxu0 0.0
    %1572 = vmatpush1.msra.mxu0 0.0
    %1573 = vmatprep.subr.mxu0 0.0
    %1574 = vmatpush1.msra.mxu0 0.0
    %1575 = vmatprep.mubr.f32.mxu0 0.0
    %1576 = vmatmul.mubr.f32.gmra.mrb[0].mxu0 %v1509
    %v1577 = vpop.f32.mrb[0].mxu0
    %v1578 = vadd.f32 %v1505, %v1577
    %v1579 = vpop.f32.mrb[0].mxu0
    %1580 = vdwg.mxu0
    %v1581 = vxor.u32 %v1578, 2147483648
    %v1582 = vmul.f32 %v1581, 1.442695
    %v1583 = vpow.pop %v1582
    %v1584 = vadd.f32 %v1583, 1.0
    %v1585 = vrcp.pop %v1584
    %v1586 = vmul.f32 1.0, %v1585
    %v1587 = vtanh.pop %v1578
    %v1588 = vmul.f32 %v1586, %v1497
    %1590 = vrot.lane.b32.xlu0 %v1587, 32
    %v1591 = vpop.permute.xlu0 %1590
    %v1593 = vmul.f32 %v1586, %v1591
    %1595 = vrot.lane.b32.xlu0 %v1593, 32
    %v1596 = vpop.permute.xlu0 %1595
    %v1598 = vadd.f32 %v1588, %v1596
    %v1599 = vtanh.pop %v1598
    %1601 = vrot.lane.b32.xlu0 %v1599, 32
    %v1602 = vpop.permute.xlu0 %1601
    %v1604 = vmul.f32 %v1586, %v1602
    %s1605 = scalar_lea.vmem [#allocation3], 40
    %v1606 = vld [vmem:[%s1605] sm:$0xff]
    %1608 = vrot.lane.b32.xlu0 %v1604, 64
    %v1609 = vpop.permute.xlu0 %1608
    %v1610 = vsel %vm84, %v1609, 0
    %1612 = vmatprep.subr.mxu0 0.0
    %1613 = vmatpush1.msra.mxu0 %v1102
    %1614 = vmatprep.subr.mxu0 0.0
    %1615 = vmatpush1.msra.mxu0 %v1103
    %1616 = vmatprep.subr.mxu0 0.0
    %1617 = vmatpush1.msra.mxu0 %v1104
    %1618 = vmatprep.subr.mxu0 0.0
    %1619 = vmatpush1.msra.mxu0 %v1105
    %1620 = vmatprep.subr.mxu0 0.0
    %1621 = vmatpush1.msra.mxu0 0.0
    %1622 = vmatprep.subr.mxu0 0.0
    %1623 = vmatpush1.msra.mxu0 0.0
    %1624 = vmatprep.subr.mxu0 0.0
    %1625 = vmatpush1.msra.mxu0 0.0
    %1626 = vmatprep.subr.mxu0 0.0
    %1627 = vmatpush1.msra.mxu0 0.0
    %1628 = vmatprep.subr.mxu0 0.0
    %1629 = vmatpush1.msra.mxu0 0.0
    %1630 = vmatprep.subr.mxu0 0.0
    %1631 = vmatpush1.msra.mxu0 0.0
    %1632 = vmatprep.subr.mxu0 0.0
    %1633 = vmatpush1.msra.mxu0 0.0
    %1634 = vmatprep.subr.mxu0 0.0
    %1635 = vmatpush1.msra.mxu0 0.0
    %1636 = vmatprep.subr.mxu0 0.0
    %1637 = vmatpush1.msra.mxu0 0.0
    %1638 = vmatprep.subr.mxu0 0.0
    %1639 = vmatpush1.msra.mxu0 0.0
    %1640 = vmatprep.subr.mxu0 0.0
    %1641 = vmatpush1.msra.mxu0 0.0
    %1642 = vmatprep.subr.mxu0 0.0
    %1643 = vmatpush1.msra.mxu0 0.0
    %1644 = vmatprep.subr.mxu0 0.0
    %1645 = vmatpush1.msra.mxu0 0.0
    %1646 = vmatprep.subr.mxu0 0.0
    %1647 = vmatpush1.msra.mxu0 0.0
    %1648 = vmatprep.subr.mxu0 0.0
    %1649 = vmatpush1.msra.mxu0 0.0
    %1650 = vmatprep.subr.mxu0 0.0
    %1651 = vmatpush1.msra.mxu0 0.0
    %1652 = vmatprep.subr.mxu0 0.0
    %1653 = vmatpush1.msra.mxu0 0.0
    %1654 = vmatprep.subr.mxu0 0.0
    %1655 = vmatpush1.msra.mxu0 0.0
    %1656 = vmatprep.subr.mxu0 0.0
    %1657 = vmatpush1.msra.mxu0 0.0
    %1658 = vmatprep.subr.mxu0 0.0
    %1659 = vmatpush1.msra.mxu0 0.0
    %1660 = vmatprep.subr.mxu0 0.0
    %1661 = vmatpush1.msra.mxu0 0.0
    %1662 = vmatprep.subr.mxu0 0.0
    %1663 = vmatpush1.msra.mxu0 0.0
    %1664 = vmatprep.subr.mxu0 0.0
    %1665 = vmatpush1.msra.mxu0 0.0
    %1666 = vmatprep.subr.mxu0 0.0
    %1667 = vmatpush1.msra.mxu0 0.0
    %1668 = vmatprep.subr.mxu0 0.0
    %1669 = vmatpush1.msra.mxu0 0.0
    %1670 = vmatprep.subr.mxu0 0.0
    %1671 = vmatpush1.msra.mxu0 0.0
    %1672 = vmatprep.subr.mxu0 0.0
    %1673 = vmatpush1.msra.mxu0 0.0
    %1674 = vmatprep.subr.mxu0 0.0
    %1675 = vmatpush1.msra.mxu0 0.0
    %1676 = vmatprep.mubr.f32.mxu0 0.0
    %1677 = vmatmul.mubr.f32.gmra.mrb[0].mxu0 %v1610
    %v1678 = vpop.f32.mrb[0].mxu0
    %v1679 = vadd.f32 %v1606, %v1678
    %v1680 = vpop.f32.mrb[0].mxu0
    %1681 = vdwg.mxu0
    %v1682 = vxor.u32 %v1679, 2147483648
    %v1683 = vmul.f32 %v1682, 1.442695
    %v1684 = vpow.pop %v1683
    %v1685 = vadd.f32 %v1684, 1.0
    %v1686 = vrcp.pop %v1685
    %v1687 = vmul.f32 1.0, %v1686
    %v1688 = vtanh.pop %v1679
    %v1689 = vmul.f32 %v1687, %v1598
    %1691 = vrot.lane.b32.xlu0 %v1688, 32
    %v1692 = vpop.permute.xlu0 %1691
    %v1694 = vmul.f32 %v1687, %v1692
    %1696 = vrot.lane.b32.xlu0 %v1694, 32
    %v1697 = vpop.permute.xlu0 %1696
    %v1699 = vadd.f32 %v1689, %v1697
    %v1700 = vtanh.pop %v1699
    %1702 = vrot.lane.b32.xlu0 %v1700, 32
    %v1703 = vpop.permute.xlu0 %1702
    %v1705 = vmul.f32 %v1687, %v1703
    %s1706 = scalar_lea.vmem [#allocation3], 48
    %v1707 = vld [vmem:[%s1706] sm:$0xff]
    %1709 = vrot.lane.b32.xlu0 %v1705, 64
    %v1710 = vpop.permute.xlu0 %1709
    %v1711 = vsel %vm84, %v1710, 0
    %1713 = vmatprep.subr.mxu0 0.0
    %1714 = vmatpush1.msra.mxu0 %v1102
    %1715 = vmatprep.subr.mxu0 0.0
    %1716 = vmatpush1.msra.mxu0 %v1103
    %1717 = vmatprep.subr.mxu0 0.0
    %1718 = vmatpush1.msra.mxu0 %v1104
    %1719 = vmatprep.subr.mxu0 0.0
    %1720 = vmatpush1.msra.mxu0 %v1105
    %1721 = vmatprep.subr.mxu0 0.0
    %1722 = vmatpush1.msra.mxu0 0.0
    %1723 = vmatprep.subr.mxu0 0.0
    %1724 = vmatpush1.msra.mxu0 0.0
    %1725 = vmatprep.subr.mxu0 0.0
    %1726 = vmatpush1.msra.mxu0 0.0
    %1727 = vmatprep.subr.mxu0 0.0
    %1728 = vmatpush1.msra.mxu0 0.0
    %1729 = vmatprep.subr.mxu0 0.0
    %1730 = vmatpush1.msra.mxu0 0.0
    %1731 = vmatprep.subr.mxu0 0.0
    %1732 = vmatpush1.msra.mxu0 0.0
    %1733 = vmatprep.subr.mxu0 0.0
    %1734 = vmatpush1.msra.mxu0 0.0
    %1735 = vmatprep.subr.mxu0 0.0
    %1736 = vmatpush1.msra.mxu0 0.0
    %1737 = vmatprep.subr.mxu0 0.0
    %1738 = vmatpush1.msra.mxu0 0.0
    %1739 = vmatprep.subr.mxu0 0.0
    %1740 = vmatpush1.msra.mxu0 0.0
    %1741 = vmatprep.subr.mxu0 0.0
    %1742 = vmatpush1.msra.mxu0 0.0
    %1743 = vmatprep.subr.mxu0 0.0
    %1744 = vmatpush1.msra.mxu0 0.0
    %1745 = vmatprep.subr.mxu0 0.0
    %1746 = vmatpush1.msra.mxu0 0.0
    %1747 = vmatprep.subr.mxu0 0.0
    %1748 = vmatpush1.msra.mxu0 0.0
    %1749 = vmatprep.subr.mxu0 0.0
    %1750 = vmatpush1.msra.mxu0 0.0
    %1751 = vmatprep.subr.mxu0 0.0
    %1752 = vmatpush1.msra.mxu0 0.0
    %1753 = vmatprep.subr.mxu0 0.0
    %1754 = vmatpush1.msra.mxu0 0.0
    %1755 = vmatprep.subr.mxu0 0.0
    %1756 = vmatpush1.msra.mxu0 0.0
    %1757 = vmatprep.subr.mxu0 0.0
    %1758 = vmatpush1.msra.mxu0 0.0
    %1759 = vmatprep.subr.mxu0 0.0
    %1760 = vmatpush1.msra.mxu0 0.0
    %1761 = vmatprep.subr.mxu0 0.0
    %1762 = vmatpush1.msra.mxu0 0.0
    %1763 = vmatprep.subr.mxu0 0.0
    %1764 = vmatpush1.msra.mxu0 0.0
    %1765 = vmatprep.subr.mxu0 0.0
    %1766 = vmatpush1.msra.mxu0 0.0
    %1767 = vmatprep.subr.mxu0 0.0
    %1768 = vmatpush1.msra.mxu0 0.0
    %1769 = vmatprep.subr.mxu0 0.0
    %1770 = vmatpush1.msra.mxu0 0.0
    %1771 = vmatprep.subr.mxu0 0.0
    %1772 = vmatpush1.msra.mxu0 0.0
    %1773 = vmatprep.subr.mxu0 0.0
    %1774 = vmatpush1.msra.mxu0 0.0
    %1775 = vmatprep.subr.mxu0 0.0
    %1776 = vmatpush1.msra.mxu0 0.0
    %1777 = vmatprep.mubr.f32.mxu0 0.0
    %1778 = vmatmul.mubr.f32.gmra.mrb[0].mxu0 %v1711
    %v1779 = vpop.f32.mrb[0].mxu0
    %v1780 = vadd.f32 %v1707, %v1779
    %v1781 = vpop.f32.mrb[0].mxu0
    %1782 = vdwg.mxu0
    %v1783 = vxor.u32 %v1780, 2147483648
    %v1784 = vmul.f32 %v1783, 1.442695
    %v1785 = vpow.pop %v1784
    %v1786 = vadd.f32 %v1785, 1.0
    %v1787 = vrcp.pop %v1786
    %v1788 = vmul.f32 1.0, %v1787
    %v1789 = vtanh.pop %v1780
    %v1790 = vmul.f32 %v1788, %v1699
    %1792 = vrot.lane.b32.xlu0 %v1789, 32
    %v1793 = vpop.permute.xlu0 %1792
    %v1795 = vmul.f32 %v1788, %v1793
    %1797 = vrot.lane.b32.xlu0 %v1795, 32
    %v1798 = vpop.permute.xlu0 %1797
    %v1800 = vadd.f32 %v1790, %v1798
    %v1801 = vtanh.pop %v1800
    %1803 = vrot.lane.b32.xlu0 %v1801, 32
    %v1804 = vpop.permute.xlu0 %1803
    %v1806 = vmul.f32 %v1788, %v1804
    %s1807 = scalar_lea.vmem [#allocation3], 56
    %v1808 = vld [vmem:[%s1807] sm:$0xff]
    %1810 = vrot.lane.b32.xlu0 %v1806, 64
    %v1811 = vpop.permute.xlu0 %1810
    %v1812 = vsel %vm84, %v1811, 0
    %1814 = vmatprep.subr.mxu0 0.0
    %1815 = vmatpush1.msra.mxu0 %v1102
    %1816 = vmatprep.subr.mxu0 0.0
    %1817 = vmatpush1.msra.mxu0 %v1103
    %1818 = vmatprep.subr.mxu0 0.0
    %1819 = vmatpush1.msra.mxu0 %v1104
    %1820 = vmatprep.subr.mxu0 0.0
    %1821 = vmatpush1.msra.mxu0 %v1105
    %1822 = vmatprep.subr.mxu0 0.0
    %1823 = vmatpush1.msra.mxu0 0.0
    %1824 = vmatprep.subr.mxu0 0.0
    %1825 = vmatpush1.msra.mxu0 0.0
    %1826 = vmatprep.subr.mxu0 0.0
    %1827 = vmatpush1.msra.mxu0 0.0
    %1828 = vmatprep.subr.mxu0 0.0
    %1829 = vmatpush1.msra.mxu0 0.0
    %1830 = vmatprep.subr.mxu0 0.0
    %1831 = vmatpush1.msra.mxu0 0.0
    %1832 = vmatprep.subr.mxu0 0.0
    %1833 = vmatpush1.msra.mxu0 0.0
    %1834 = vmatprep.subr.mxu0 0.0
    %1835 = vmatpush1.msra.mxu0 0.0
    %1836 = vmatprep.subr.mxu0 0.0
    %1837 = vmatpush1.msra.mxu0 0.0
    %1838 = vmatprep.subr.mxu0 0.0
    %1839 = vmatpush1.msra.mxu0 0.0
    %1840 = vmatprep.subr.mxu0 0.0
    %1841 = vmatpush1.msra.mxu0 0.0
    %1842 = vmatprep.subr.mxu0 0.0
    %1843 = vmatpush1.msra.mxu0 0.0
    %1844 = vmatprep.subr.mxu0 0.0
    %1845 = vmatpush1.msra.mxu0 0.0
    %1846 = vmatprep.subr.mxu0 0.0
    %1847 = vmatpush1.msra.mxu0 0.0
    %1848 = vmatprep.subr.mxu0 0.0
    %1849 = vmatpush1.msra.mxu0 0.0
    %1850 = vmatprep.subr.mxu0 0.0
    %1851 = vmatpush1.msra.mxu0 0.0
    %1852 = vmatprep.subr.mxu0 0.0
    %1853 = vmatpush1.msra.mxu0 0.0
    %1854 = vmatprep.subr.mxu0 0.0
    %1855 = vmatpush1.msra.mxu0 0.0
    %1856 = vmatprep.subr.mxu0 0.0
    %1857 = vmatpush1.msra.mxu0 0.0
    %1858 = vmatprep.subr.mxu0 0.0
    %1859 = vmatpush1.msra.mxu0 0.0
    %1860 = vmatprep.subr.mxu0 0.0
    %1861 = vmatpush1.msra.mxu0 0.0
    %1862 = vmatprep.subr.mxu0 0.0
    %1863 = vmatpush1.msra.mxu0 0.0
    %1864 = vmatprep.subr.mxu0 0.0
    %1865 = vmatpush1.msra.mxu0 0.0
    %1866 = vmatprep.subr.mxu0 0.0
    %1867 = vmatpush1.msra.mxu0 0.0
    %1868 = vmatprep.subr.mxu0 0.0
    %1869 = vmatpush1.msra.mxu0 0.0
    %1870 = vmatprep.subr.mxu0 0.0
    %1871 = vmatpush1.msra.mxu0 0.0
    %1872 = vmatprep.subr.mxu0 0.0
    %1873 = vmatpush1.msra.mxu0 0.0
    %1874 = vmatprep.subr.mxu0 0.0
    %1875 = vmatpush1.msra.mxu0 0.0
    %1876 = vmatprep.subr.mxu0 0.0
    %1877 = vmatpush1.msra.mxu0 0.0
    %1878 = vmatprep.mubr.f32.mxu0 0.0
    %1879 = vmatmul.mubr.f32.gmra.mrb[0].mxu0 %v1812
    %v1880 = vpop.f32.mrb[0].mxu0
    %v1881 = vadd.f32 %v1808, %v1880
    %v1882 = vpop.f32.mrb[0].mxu0
    %1883 = vdwg.mxu0
    %v1884 = vxor.u32 %v1881, 2147483648
    %v1885 = vmul.f32 %v1884, 1.442695
    %v1886 = vpow.pop %v1885
    %v1887 = vadd.f32 %v1886, 1.0
    %v1888 = vrcp.pop %v1887
    %v1889 = vmul.f32 1.0, %v1888
    %v1890 = vtanh.pop %v1881
    %v1891 = vmul.f32 %v1889, %v1800
    %1893 = vrot.lane.b32.xlu0 %v1890, 32
    %v1894 = vpop.permute.xlu0 %1893
    %v1896 = vmul.f32 %v1889, %v1894
    %1898 = vrot.lane.b32.xlu0 %v1896, 32
    %v1899 = vpop.permute.xlu0 %1898
    %v1901 = vadd.f32 %v1891, %v1899
    %v1902 = vtanh.pop %v1901
    %1904 = vrot.lane.b32.xlu0 %v1902, 32
    %v1905 = vpop.permute.xlu0 %1904
    %v1907 = vmul.f32 %v1889, %v1905
    %v1908 = vld [vmem:[#allocation10] sm:$0xff]
    %v1909 = vld [vmem:[#allocation10 + $0x8] sm:$0xff]
    %v1910 = vld [vmem:[#allocation10 + $0x10] sm:$0xff]
    %v1911 = vld [vmem:[#allocation10 + $0x18] sm:$0xff]
    %v1912 = vld [vmem:[%s5] sm:$0x1]
    %v1914 = vlaneseq
    %v1915 = vshrl.u32 %v1914, 7
    %v1916 = vsub.s32 0, %v1915
    %v1917 = vrot.slane %v1912, %v1916
    %1920 = vrot.lane.b32.xlu0 %v1907, 64
    %v1921 = vpop.permute.xlu0 %1920
    %v1922 = vsel %vm84, %v1921, 0
    %1924 = vmatprep.subr.mxu0 0.0
    %1925 = vmatpush1.msra.mxu0 %v1908
    %1926 = vmatprep.subr.mxu0 0.0
    %1927 = vmatpush1.msra.mxu0 %v1909
    %1928 = vmatprep.subr.mxu0 0.0
    %1929 = vmatpush1.msra.mxu0 %v1910
    %1930 = vmatprep.subr.mxu0 0.0
    %1931 = vmatpush1.msra.mxu0 %v1911
    %1932 = vmatprep.subr.mxu0 0.0
    %1933 = vmatpush1.msra.mxu0 0.0
    %1934 = vmatprep.subr.mxu0 0.0
    %1935 = vmatpush1.msra.mxu0 0.0
    %1936 = vmatprep.subr.mxu0 0.0
    %1937 = vmatpush1.msra.mxu0 0.0
    %1938 = vmatprep.subr.mxu0 0.0
    %1939 = vmatpush1.msra.mxu0 0.0
    %1940 = vmatprep.subr.mxu0 0.0
    %1941 = vmatpush1.msra.mxu0 0.0
    %1942 = vmatprep.subr.mxu0 0.0
    %1943 = vmatpush1.msra.mxu0 0.0
    %1944 = vmatprep.subr.mxu0 0.0
    %1945 = vmatpush1.msra.mxu0 0.0
    %1946 = vmatprep.subr.mxu0 0.0
    %1947 = vmatpush1.msra.mxu0 0.0
    %1948 = vmatprep.subr.mxu0 0.0
    %1949 = vmatpush1.msra.mxu0 0.0
    %1950 = vmatprep.subr.mxu0 0.0
    %1951 = vmatpush1.msra.mxu0 0.0
    %1952 = vmatprep.subr.mxu0 0.0
    %1953 = vmatpush1.msra.mxu0 0.0
    %1954 = vmatprep.subr.mxu0 0.0
    %1955 = vmatpush1.msra.mxu0 0.0
    %1956 = vmatprep.subr.mxu0 0.0
    %1957 = vmatpush1.msra.mxu0 0.0
    %1958 = vmatprep.subr.mxu0 0.0
    %1959 = vmatpush1.msra.mxu0 0.0
    %1960 = vmatprep.subr.mxu0 0.0
    %1961 = vmatpush1.msra.mxu0 0.0
    %1962 = vmatprep.subr.mxu0 0.0
    %1963 = vmatpush1.msra.mxu0 0.0
    %1964 = vmatprep.subr.mxu0 0.0
    %1965 = vmatpush1.msra.mxu0 0.0
    %1966 = vmatprep.subr.mxu0 0.0
    %1967 = vmatpush1.msra.mxu0 0.0
    %1968 = vmatprep.subr.mxu0 0.0
    %1969 = vmatpush1.msra.mxu0 0.0
    %1970 = vmatprep.subr.mxu0 0.0
    %1971 = vmatpush1.msra.mxu0 0.0
    %1972 = vmatprep.subr.mxu0 0.0
    %1973 = vmatpush1.msra.mxu0 0.0
    %1974 = vmatprep.subr.mxu0 0.0
    %1975 = vmatpush1.msra.mxu0 0.0
    %1976 = vmatprep.subr.mxu0 0.0
    %1977 = vmatpush1.msra.mxu0 0.0
    %1978 = vmatprep.subr.mxu0 0.0
    %1979 = vmatpush1.msra.mxu0 0.0
    %1980 = vmatprep.subr.mxu0 0.0
    %1981 = vmatpush1.msra.mxu0 0.0
    %1982 = vmatprep.subr.mxu0 0.0
    %1983 = vmatpush1.msra.mxu0 0.0
    %1984 = vmatprep.subr.mxu0 0.0
    %1985 = vmatpush1.msra.mxu0 0.0
    %1986 = vmatprep.subr.mxu0 0.0
    %1987 = vmatpush1.msra.mxu0 0.0
    %1988 = vmatprep.mubr.f32.mxu0 0.0
    %1989 = vmatmul.mubr.f32.gmra.mrb[0].mxu0 %v1922
    %v1990 = vpop.f32.mrb[0].mxu0
    %v1991 = vadd.f32 %v1917, %v1990
    %v1992 = vpop.f32.mrb[0].mxu0
    %1993 = vdwg.mxu0
    %1994 = vst [vmem:[#allocation12] sm:$0xff] %v1991
    // Predicated region
    $region42: #{tpu_custom_call.1} parent=1 // pred_check
      _
    $region43: #{tpu_custom_call.1} parent=1 // pred_check_branch
      %1996 = sbr.rel (0) target = $region45
    $region44: #{tpu_custom_call.1} parent=1 // pred_region
      %s1998 = ssub.s32 128, 128
      %1999 = vsyncadd [#allocation6], %s1998
      %s2001 = sshll.u32 [#allocation12], 4
      %s2002 = int_to_ptr.vmem [resolvable:$true] %s2001
      %2004 = dma.vmem_to_hbm [thread:$0]  %s2002, 128, %s6, [#allocation6]
    $region45: #{tpu_custom_call.1} parent=1 // pred_fallthru
      _
    // Predicated region
    $region46: #{tpu_custom_call.1} parent=1 // pred_check
      _
    $region47: #{tpu_custom_call.1} parent=1 // pred_check_branch
      %2006 = sbr.rel (0) target = $region49
    $region48: #{tpu_custom_call.1} parent=1 // pred_region
      %2007 = dma.done [#allocation6], 128
    $region49: #{tpu_custom_call.1} parent=1 // pred_fallthru
      _
    %2008 = vsyncpa [#allocation5], 1
    %2009 = vsyncpa [#allocation8], 1
    %2010 = vsyncpa [#allocation11], 1
    %2011 = vsyncpa [#allocation6], 1

</llo_original>
